<compile_context>
chip_gen: v7x
topology: tpu7x:2x2x1
jax: 0.10.0
libtpu: 0.0.40
codegen_flags: <defaults>
</compile_context>

<pallas_src>
import functools

import jax
import jax.numpy as jnp
from jax.experimental import pallas as pl
from jax.experimental.pallas import tpu as pltpu


def resblock_kernel(x_ref, w1_ref, b1_ref, w2_ref, b2_ref,
                    fc1w_ref, fc1b_ref, fc2w_ref, fc2b_ref,
                    mask_ref, out_ref, *, W):
    """One image of ResBlock in lane-dense (C, H*W) layout."""
    C, HW = out_ref.shape
    inv_hw = 1.0 / HW
    x = x_ref[...]                                               # (C, HW) f32

    def conv3x3(src, w9_ref, b_ref):
        # 3x3 "same" conv: 9 static lane rolls (XLU slot) of the flattened image;
        # out-of-image taps are zeroed by precomputed masks (also prevents the
        # circular roll from wrapping across row/image edges). Each masked tap is
        # accumulated via one bf16 (C,C)@(C,HW) MXU matmul into an f32 accumulator,
        # so no (9C, HW) im2col buffer is ever materialized.
        acc = jnp.zeros((C, HW), jnp.float32)
        t = 0
        for dy in (-1, 0, 1):
            for dx in (-1, 0, 1):
                s = dy * W + dx
                if s == 0:
                    tap = src                                    # center tap: mask == 1
                else:
                    tap = pltpu.roll(src, shift=(-s) % HW, axis=1) * mask_ref[t:t + 1, :]
                acc = acc + jnp.dot(w9_ref[t], tap.astype(jnp.bfloat16),
                                    preferred_element_type=jnp.float32)
                t += 1
        return acc + b_ref[...]

    # --- two 3x3 convs (no activation in between, per the PyTorch module) --------
    y = conv3x3(x, w1_ref, b1_ref)
    y = conv3x3(y, w2_ref, b2_ref)

    # --- squeeze-and-excite: pool the conv output, apply to the input ------------
    pooled = jnp.sum(y, axis=-1, keepdims=True) * inv_hw         # (C, 1)  XLU lane reduce
    h = jnp.dot(fc1w_ref[...], pooled,
                preferred_element_type=jnp.float32) + fc1b_ref[...]          # (Csq, 1)
    h = jnp.maximum(h, 0.0)
    o = jnp.dot(fc2w_ref[...], h,
                preferred_element_type=jnp.float32) + fc2b_ref[...]          # (2C, 1)
    scale = jax.nn.sigmoid(o[:C, :]) + 1.0        # residual folded into the SE scale
    shift = o[C:, :]

    # Epilogue: plain column broadcasts (VPU), lane-dense unmasked stores.
    out_ref[...] = jnp.maximum(x * scale + shift, 0.0).astype(out_ref.dtype)


def resblock_forward(x_nchw, params):
    B, C, H, W = x_nchw.shape
    HW = H * W
    Csq = params["fc1_w"].shape[1]

    # NCHW -> (B, C, H*W) is a free contiguous reshape (no HBM relayout).
    x_flat = x_nchw.reshape(B, C, HW)

    # Per-tap (Cout, Cin) conv weights, tap order (dy, dx) row-major; bf16 MXU operands.
    def per_tap(w):  # HWIO (3, 3, Cin, Cout) -> (9, Cout, Cin)
        return jnp.transpose(w, (0, 1, 3, 2)).reshape(9, C, C).astype(jnp.bfloat16)

    w1t, w2t = per_tap(params["w1"]), per_tap(params["w2"])
    b1c, b2c = params["b1"].reshape(C, 1), params["b2"].reshape(C, 1)
    fc1_wt, fc1_bc = params["fc1_w"].T, params["fc1_b"].reshape(Csq, 1)
    fc2_wt, fc2_bc = params["fc2_w"].T, params["fc2_b"].reshape(2 * C, 1)

    # Per-tap validity masks over the flattened (H, W) lane axis: zeroing the
    # out-of-image taps implements "same" padding for the circular lane rolls.
    p = jnp.arange(HW)
    hh, ww = p // W, p % W
    masks = []
    for dy in (-1, 0, 1):
        for dx in (-1, 0, 1):
            masks.append((ww + dx >= 0) & (ww + dx < W) & (hh + dy >= 0) & (hh + dy < H))
    mask9 = jnp.stack(masks).astype(jnp.float32)                 # (9, HW)

    consts = (w1t, b1c, w2t, b2c, fc1_wt, fc1_bc, fc2_wt, fc2_bc, mask9)

    def _const_spec(arr):
        n = arr.ndim
        # Constant index_map -> Pallas keeps the resident block across grid steps
        # (no re-DMA). For production shapes these could additionally be marked
        # pipeline_mode=pl.Buffered(1) to drop the second constant buffer.
        return pl.BlockSpec(arr.shape, lambda b, n=n: (0,) * n)

    # Explicit VMEM budget: double-buffered in/out blocks + (double-buffered)
    # constants + ~12 live (C, HW) f32 temporaries in the body, with 2x headroom.
    block_bytes = C * HW * 4
    const_bytes = sum(int(c.size) * c.dtype.itemsize for c in consts)
    est = 4 * block_bytes + 2 * const_bytes + 12 * block_bytes
    vmem_limit = int(min(96 * 2**20, max(32 * 2**20, 2 * est)))

    kernel = functools.partial(resblock_kernel, W=W)

    # For very large H*W per image, add H-strip tiling with a 1-row halo (and a
    # separate pooled-stats pass) so each block still fits v7x's 64 MiB VMEM.
    out_flat = pl.pallas_call(
        kernel,
        out_shape=jax.ShapeDtypeStruct((B, C, HW), jnp.float32),
        grid=(B,),
        in_specs=[pl.BlockSpec((None, C, HW), lambda b: (b, 0, 0))]
                 + [_const_spec(c) for c in consts],
        out_specs=pl.BlockSpec((None, C, HW), lambda b: (b, 0, 0)),
        compiler_params=pltpu.CompilerParams(
            dimension_semantics=("parallel",),
            vmem_limit_bytes=vmem_limit),
    )(x_flat, *consts)

    return out_flat.reshape(B, C, H, W)


def init_params(key, C, squeeze_rate=4):
    """Deterministic PyTorch-like uniform init (shapes from ResBlock.__init__)."""
    Csq = int(C // squeeze_rate)
    ks = jax.random.split(key, 8)

    def u(k, shape, fan_in):
        bound = (1.0 / fan_in) ** 0.5
        return jax.random.uniform(k, shape, jnp.float32, -bound, bound)

    return dict(
        w1=u(ks[0], (3, 3, C, C), 9 * C),   b1=u(ks[1], (1, C), 9 * C),
        w2=u(ks[2], (3, 3, C, C), 9 * C),   b2=u(ks[3], (1, C), 9 * C),
        fc1_w=u(ks[4], (C, Csq), C),        fc1_b=u(ks[5], (1, Csq), C),
        fc2_w=u(ks[6], (Csq, 2 * C), Csq),  fc2_b=u(ks[7], (1, 2 * C), Csq),
    )


def resblock_ref(x_nchw, p):
    """Pure-JAX reference of the PyTorch forward."""
    x = jnp.transpose(x_nchw, (0, 2, 3, 1))
    dn = jax.lax.conv_dimension_numbers(x.shape, p["w1"].shape,
                                        ("NHWC", "HWIO", "NHWC"))
    y1 = jax.lax.conv_general_dilated(x, p["w1"], (1, 1), "SAME",
                                      dimension_numbers=dn) + p["b1"].reshape(1, 1, 1, -1)
    y2 = jax.lax.conv_general_dilated(y1, p["w2"], (1, 1), "SAME",
                                      dimension_numbers=dn) + p["b2"].reshape(1, 1, 1, -1)
    C = x.shape[-1]
    pooled = jnp.mean(y2, axis=(1, 2))                        # (B, C)
    h = jnp.maximum(pooled @ p["fc1_w"] + p["fc1_b"], 0.0)
    o = h @ p["fc2_w"] + p["fc2_b"]                           # (B, 2C)
    z = jax.nn.sigmoid(o[:, :C])[:, None, None, :]
    b = o[:, C:][:, None, None, :]
    out = jnp.maximum(x * z + b + x, 0.0)
    return jnp.transpose(out, (0, 3, 1, 2))


if __name__ == "__main__":
    key = jax.random.PRNGKey(0)
    B, C, H, W = 2, 8, 16, 16
    kx, kp = jax.random.split(key)
    x = jax.random.normal(kx, (B, C, H, W), jnp.float32)
    params = init_params(kp, C)

    out = resblock_forward(x, params)
    jax.block_until_ready(out)

    ref = resblock_ref(x, params)
    max_err = float(jnp.max(jnp.abs(out - ref)))
    assert jnp.allclose(out, ref, atol=1e-2, rtol=1e-2), f"max_err={max_err}"
    print("KERNEL_OK")
</pallas_src>

<mosaic_0001>
module attributes {stable_mosaic.version = 11 : i64} {
  func.func @resblock_kernel(%arg0: i32, %arg1: memref<1x8x256xf32, #tpu.memory_space<vmem>>, %arg2: memref<9x8x8xbf16, #tpu.memory_space<vmem>>, %arg3: memref<8x1xf32, #tpu.memory_space<vmem>>, %arg4: memref<9x8x8xbf16, #tpu.memory_space<vmem>>, %arg5: memref<8x1xf32, #tpu.memory_space<vmem>>, %arg6: memref<2x8xf32, #tpu.memory_space<vmem>>, %arg7: memref<2x1xf32, #tpu.memory_space<vmem>>, %arg8: memref<16x2xf32, #tpu.memory_space<vmem>>, %arg9: memref<16x1xf32, #tpu.memory_space<vmem>>, %arg10: memref<9x256xf32, #tpu.memory_space<vmem>>, %arg11: memref<1x8x256xf32, #tpu.memory_space<vmem>>) attributes {dimension_semantics = [#tpu.dimension_semantics<parallel>], iteration_bounds = array<i64: 2>, scalar_prefetch = 0 : i64, scratch_operands = 0 : i64, tpu.core_type = #tpu.core_type<tc>, window_params = [{transform_indices = @transform_0, window_bounds = array<i64: 1, 8, 256>}, {pipeline_mode = #tpu.pipeline_mode<synchronous>, transform_indices = @transform_1, window_bounds = array<i64: 9, 8, 8>}, {pipeline_mode = #tpu.pipeline_mode<synchronous>, transform_indices = @transform_2, window_bounds = array<i64: 8, 1>}, {pipeline_mode = #tpu.pipeline_mode<synchronous>, transform_indices = @transform_3, window_bounds = array<i64: 9, 8, 8>}, {pipeline_mode = #tpu.pipeline_mode<synchronous>, transform_indices = @transform_4, window_bounds = array<i64: 8, 1>}, {pipeline_mode = #tpu.pipeline_mode<synchronous>, transform_indices = @transform_5, window_bounds = array<i64: 2, 8>}, {pipeline_mode = #tpu.pipeline_mode<synchronous>, transform_indices = @transform_6, window_bounds = array<i64: 2, 1>}, {pipeline_mode = #tpu.pipeline_mode<synchronous>, transform_indices = @transform_7, window_bounds = array<i64: 16, 2>}, {pipeline_mode = #tpu.pipeline_mode<synchronous>, transform_indices = @transform_8, window_bounds = array<i64: 16, 1>}, {pipeline_mode = #tpu.pipeline_mode<synchronous>, transform_indices = @transform_9, window_bounds = array<i64: 9, 256>}, {transform_indices = @transform_10, window_bounds = array<i64: 1, 8, 256>}]} {
    %c0 = arith.constant 0 : index
    %c0_0 = arith.constant 0 : index
    %c0_1 = arith.constant 0 : index
    %0 = vector.load %arg1[%c0, %c0_0, %c0_1] : memref<1x8x256xf32, #tpu.memory_space<vmem>>, vector<1x8x256xf32>
    %1 = vector.shape_cast %0 : vector<1x8x256xf32> to vector<8x256xf32>
    %cst = arith.constant 0.000000e+00 : f32
    %2 = vector.broadcast %cst : f32 to vector<8x256xf32>
    %c17_i32 = arith.constant 17 : i32
    %3 = tpu.dynamic_rotate %1 by %c17_i32 dim 1 : vector<8x256xf32>, i32 -> vector<8x256xf32>
    %c0_2 = arith.constant 0 : index
    %c0_3 = arith.constant 0 : index
    %4 = vector.load %arg10[%c0_2, %c0_3] : memref<9x256xf32, #tpu.memory_space<vmem>>, vector<1x256xf32>
    %5 = vector.broadcast %4 : vector<1x256xf32> to vector<8x256xf32>
    %6 = arith.mulf %3, %5 : vector<8x256xf32>
    %c0_4 = arith.constant 0 : index
    %c0_5 = arith.constant 0 : index
    %c0_6 = arith.constant 0 : index
    %7 = vector.load %arg2[%c0_4, %c0_5, %c0_6] : memref<9x8x8xbf16, #tpu.memory_space<vmem>>, vector<1x8x8xbf16>
    %8 = vector.shape_cast %7 : vector<1x8x8xbf16> to vector<8x8xbf16>
    %9 = arith.truncf %6 : vector<8x256xf32> to vector<8x256xbf16>
    %cst_7 = arith.constant dense<0.000000e+00> : vector<8x256xf32>
    %10 = tpu.matmul %8, %9, %cst_7 {dimension_numbers = #tpu.dot_dimension_numbers<[1], [0], [0], [1], [0, 0, 1, 1], [], []>} : vector<8x8xbf16>, vector<8x256xbf16>, vector<8x256xf32> -> vector<8x256xf32>
    %11 = arith.addf %2, %10 : vector<8x256xf32>
    %c16_i32 = arith.constant 16 : i32
    %12 = tpu.dynamic_rotate %1 by %c16_i32 dim 1 : vector<8x256xf32>, i32 -> vector<8x256xf32>
    %c1 = arith.constant 1 : index
    %c0_8 = arith.constant 0 : index
    %13 = vector.load %arg10[%c1, %c0_8] : memref<9x256xf32, #tpu.memory_space<vmem>>, vector<1x256xf32>
    %14 = vector.broadcast %13 : vector<1x256xf32> to vector<8x256xf32>
    %15 = arith.mulf %12, %14 : vector<8x256xf32>
    %c1_9 = arith.constant 1 : index
    %c0_10 = arith.constant 0 : index
    %c0_11 = arith.constant 0 : index
    %16 = vector.load %arg2[%c1_9, %c0_10, %c0_11] : memref<9x8x8xbf16, #tpu.memory_space<vmem>>, vector<1x8x8xbf16>
    %17 = vector.shape_cast %16 : vector<1x8x8xbf16> to vector<8x8xbf16>
    %18 = arith.truncf %15 : vector<8x256xf32> to vector<8x256xbf16>
    %cst_12 = arith.constant dense<0.000000e+00> : vector<8x256xf32>
    %19 = tpu.matmul %17, %18, %cst_12 {dimension_numbers = #tpu.dot_dimension_numbers<[1], [0], [0], [1], [0, 0, 1, 1], [], []>} : vector<8x8xbf16>, vector<8x256xbf16>, vector<8x256xf32> -> vector<8x256xf32>
    %20 = arith.addf %11, %19 : vector<8x256xf32>
    %c15_i32 = arith.constant 15 : i32
    %21 = tpu.dynamic_rotate %1 by %c15_i32 dim 1 : vector<8x256xf32>, i32 -> vector<8x256xf32>
    %c2 = arith.constant 2 : index
    %c0_13 = arith.constant 0 : index
    %22 = vector.load %arg10[%c2, %c0_13] : memref<9x256xf32, #tpu.memory_space<vmem>>, vector<1x256xf32>
    %23 = vector.broadcast %22 : vector<1x256xf32> to vector<8x256xf32>
    %24 = arith.mulf %21, %23 : vector<8x256xf32>
    %c2_14 = arith.constant 2 : index
    %c0_15 = arith.constant 0 : index
    %c0_16 = arith.constant 0 : index
    %25 = vector.load %arg2[%c2_14, %c0_15, %c0_16] : memref<9x8x8xbf16, #tpu.memory_space<vmem>>, vector<1x8x8xbf16>
    %26 = vector.shape_cast %25 : vector<1x8x8xbf16> to vector<8x8xbf16>
    %27 = arith.truncf %24 : vector<8x256xf32> to vector<8x256xbf16>
    %cst_17 = arith.constant dense<0.000000e+00> : vector<8x256xf32>
    %28 = tpu.matmul %26, %27, %cst_17 {dimension_numbers = #tpu.dot_dimension_numbers<[1], [0], [0], [1], [0, 0, 1, 1], [], []>} : vector<8x8xbf16>, vector<8x256xbf16>, vector<8x256xf32> -> vector<8x256xf32>
    %29 = arith.addf %20, %28 : vector<8x256xf32>
    %c1_i32 = arith.constant 1 : i32
    %30 = tpu.dynamic_rotate %1 by %c1_i32 dim 1 : vector<8x256xf32>, i32 -> vector<8x256xf32>
    %c3 = arith.constant 3 : index
    %c0_18 = arith.constant 0 : index
    %31 = vector.load %arg10[%c3, %c0_18] : memref<9x256xf32, #tpu.memory_space<vmem>>, vector<1x256xf32>
    %32 = vector.broadcast %31 : vector<1x256xf32> to vector<8x256xf32>
    %33 = arith.mulf %30, %32 : vector<8x256xf32>
    %c3_19 = arith.constant 3 : index
    %c0_20 = arith.constant 0 : index
    %c0_21 = arith.constant 0 : index
    %34 = vector.load %arg2[%c3_19, %c0_20, %c0_21] : memref<9x8x8xbf16, #tpu.memory_space<vmem>>, vector<1x8x8xbf16>
    %35 = vector.shape_cast %34 : vector<1x8x8xbf16> to vector<8x8xbf16>
    %36 = arith.truncf %33 : vector<8x256xf32> to vector<8x256xbf16>
    %cst_22 = arith.constant dense<0.000000e+00> : vector<8x256xf32>
    %37 = tpu.matmul %35, %36, %cst_22 {dimension_numbers = #tpu.dot_dimension_numbers<[1], [0], [0], [1], [0, 0, 1, 1], [], []>} : vector<8x8xbf16>, vector<8x256xbf16>, vector<8x256xf32> -> vector<8x256xf32>
    %38 = arith.addf %29, %37 : vector<8x256xf32>
    %c4 = arith.constant 4 : index
    %c0_23 = arith.constant 0 : index
    %c0_24 = arith.constant 0 : index
    %39 = vector.load %arg2[%c4, %c0_23, %c0_24] : memref<9x8x8xbf16, #tpu.memory_space<vmem>>, vector<1x8x8xbf16>
    %40 = vector.shape_cast %39 : vector<1x8x8xbf16> to vector<8x8xbf16>
    %41 = arith.truncf %1 : vector<8x256xf32> to vector<8x256xbf16>
    %cst_25 = arith.constant dense<0.000000e+00> : vector<8x256xf32>
    %42 = tpu.matmul %40, %41, %cst_25 {dimension_numbers = #tpu.dot_dimension_numbers<[1], [0], [0], [1], [0, 0, 1, 1], [], []>} : vector<8x8xbf16>, vector<8x256xbf16>, vector<8x256xf32> -> vector<8x256xf32>
    %43 = arith.addf %38, %42 : vector<8x256xf32>
    %c255_i32 = arith.constant 255 : i32
    %44 = tpu.dynamic_rotate %1 by %c255_i32 dim 1 : vector<8x256xf32>, i32 -> vector<8x256xf32>
    %c5 = arith.constant 5 : index
    %c0_26 = arith.constant 0 : index
    %45 = vector.load %arg10[%c5, %c0_26] : memref<9x256xf32, #tpu.memory_space<vmem>>, vector<1x256xf32>
    %46 = vector.broadcast %45 : vector<1x256xf32> to vector<8x256xf32>
    %47 = arith.mulf %44, %46 : vector<8x256xf32>
    %c5_27 = arith.constant 5 : index
    %c0_28 = arith.constant 0 : index
    %c0_29 = arith.constant 0 : index
    %48 = vector.load %arg2[%c5_27, %c0_28, %c0_29] : memref<9x8x8xbf16, #tpu.memory_space<vmem>>, vector<1x8x8xbf16>
    %49 = vector.shape_cast %48 : vector<1x8x8xbf16> to vector<8x8xbf16>
    %50 = arith.truncf %47 : vector<8x256xf32> to vector<8x256xbf16>
    %cst_30 = arith.constant dense<0.000000e+00> : vector<8x256xf32>
    %51 = tpu.matmul %49, %50, %cst_30 {dimension_numbers = #tpu.dot_dimension_numbers<[1], [0], [0], [1], [0, 0, 1, 1], [], []>} : vector<8x8xbf16>, vector<8x256xbf16>, vector<8x256xf32> -> vector<8x256xf32>
    %52 = arith.addf %43, %51 : vector<8x256xf32>
    %c241_i32 = arith.constant 241 : i32
    %53 = tpu.dynamic_rotate %1 by %c241_i32 dim 1 : vector<8x256xf32>, i32 -> vector<8x256xf32>
    %c6 = arith.constant 6 : index
    %c0_31 = arith.constant 0 : index
    %54 = vector.load %arg10[%c6, %c0_31] : memref<9x256xf32, #tpu.memory_space<vmem>>, vector<1x256xf32>
    %55 = vector.broadcast %54 : vector<1x256xf32> to vector<8x256xf32>
    %56 = arith.mulf %53, %55 : vector<8x256xf32>
    %c6_32 = arith.constant 6 : index
    %c0_33 = arith.constant 0 : index
    %c0_34 = arith.constant 0 : index
    %57 = vector.load %arg2[%c6_32, %c0_33, %c0_34] : memref<9x8x8xbf16, #tpu.memory_space<vmem>>, vector<1x8x8xbf16>
    %58 = vector.shape_cast %57 : vector<1x8x8xbf16> to vector<8x8xbf16>
    %59 = arith.truncf %56 : vector<8x256xf32> to vector<8x256xbf16>
    %cst_35 = arith.constant dense<0.000000e+00> : vector<8x256xf32>
    %60 = tpu.matmul %58, %59, %cst_35 {dimension_numbers = #tpu.dot_dimension_numbers<[1], [0], [0], [1], [0, 0, 1, 1], [], []>} : vector<8x8xbf16>, vector<8x256xbf16>, vector<8x256xf32> -> vector<8x256xf32>
    %61 = arith.addf %52, %60 : vector<8x256xf32>
    %c240_i32 = arith.constant 240 : i32
    %62 = tpu.dynamic_rotate %1 by %c240_i32 dim 1 : vector<8x256xf32>, i32 -> vector<8x256xf32>
    %c7 = arith.constant 7 : index
    %c0_36 = arith.constant 0 : index
    %63 = vector.load %arg10[%c7, %c0_36] : memref<9x256xf32, #tpu.memory_space<vmem>>, vector<1x256xf32>
    %64 = vector.broadcast %63 : vector<1x256xf32> to vector<8x256xf32>
    %65 = arith.mulf %62, %64 : vector<8x256xf32>
    %c7_37 = arith.constant 7 : index
    %c0_38 = arith.constant 0 : index
    %c0_39 = arith.constant 0 : index
    %66 = vector.load %arg2[%c7_37, %c0_38, %c0_39] : memref<9x8x8xbf16, #tpu.memory_space<vmem>>, vector<1x8x8xbf16>
    %67 = vector.shape_cast %66 : vector<1x8x8xbf16> to vector<8x8xbf16>
    %68 = arith.truncf %65 : vector<8x256xf32> to vector<8x256xbf16>
    %cst_40 = arith.constant dense<0.000000e+00> : vector<8x256xf32>
    %69 = tpu.matmul %67, %68, %cst_40 {dimension_numbers = #tpu.dot_dimension_numbers<[1], [0], [0], [1], [0, 0, 1, 1], [], []>} : vector<8x8xbf16>, vector<8x256xbf16>, vector<8x256xf32> -> vector<8x256xf32>
    %70 = arith.addf %61, %69 : vector<8x256xf32>
    %c239_i32 = arith.constant 239 : i32
    %71 = tpu.dynamic_rotate %1 by %c239_i32 dim 1 : vector<8x256xf32>, i32 -> vector<8x256xf32>
    %c8 = arith.constant 8 : index
    %c0_41 = arith.constant 0 : index
    %72 = vector.load %arg10[%c8, %c0_41] : memref<9x256xf32, #tpu.memory_space<vmem>>, vector<1x256xf32>
    %73 = vector.broadcast %72 : vector<1x256xf32> to vector<8x256xf32>
    %74 = arith.mulf %71, %73 : vector<8x256xf32>
    %c8_42 = arith.constant 8 : index
    %c0_43 = arith.constant 0 : index
    %c0_44 = arith.constant 0 : index
    %75 = vector.load %arg2[%c8_42, %c0_43, %c0_44] : memref<9x8x8xbf16, #tpu.memory_space<vmem>>, vector<1x8x8xbf16>
    %76 = vector.shape_cast %75 : vector<1x8x8xbf16> to vector<8x8xbf16>
    %77 = arith.truncf %74 : vector<8x256xf32> to vector<8x256xbf16>
    %cst_45 = arith.constant dense<0.000000e+00> : vector<8x256xf32>
    %78 = tpu.matmul %76, %77, %cst_45 {dimension_numbers = #tpu.dot_dimension_numbers<[1], [0], [0], [1], [0, 0, 1, 1], [], []>} : vector<8x8xbf16>, vector<8x256xbf16>, vector<8x256xf32> -> vector<8x256xf32>
    %79 = arith.addf %70, %78 : vector<8x256xf32>
    %c0_46 = arith.constant 0 : index
    %c0_47 = arith.constant 0 : index
    %80 = vector.load %arg3[%c0_46, %c0_47] : memref<8x1xf32, #tpu.memory_space<vmem>>, vector<8x1xf32>
    %81 = vector.broadcast %80 : vector<8x1xf32> to vector<8x256xf32>
    %82 = arith.addf %79, %81 : vector<8x256xf32>
    %cst_48 = arith.constant 0.000000e+00 : f32
    %83 = vector.broadcast %cst_48 : f32 to vector<8x256xf32>
    %c17_i32_49 = arith.constant 17 : i32
    %84 = tpu.dynamic_rotate %82 by %c17_i32_49 dim 1 : vector<8x256xf32>, i32 -> vector<8x256xf32>
    %c0_50 = arith.constant 0 : index
    %c0_51 = arith.constant 0 : index
    %85 = vector.load %arg10[%c0_50, %c0_51] : memref<9x256xf32, #tpu.memory_space<vmem>>, vector<1x256xf32>
    %86 = vector.broadcast %85 : vector<1x256xf32> to vector<8x256xf32>
    %87 = arith.mulf %84, %86 : vector<8x256xf32>
    %c0_52 = arith.constant 0 : index
    %c0_53 = arith.constant 0 : index
    %c0_54 = arith.constant 0 : index
    %88 = vector.load %arg4[%c0_52, %c0_53, %c0_54] : memref<9x8x8xbf16, #tpu.memory_space<vmem>>, vector<1x8x8xbf16>
    %89 = vector.shape_cast %88 : vector<1x8x8xbf16> to vector<8x8xbf16>
    %90 = arith.truncf %87 : vector<8x256xf32> to vector<8x256xbf16>
    %cst_55 = arith.constant dense<0.000000e+00> : vector<8x256xf32>
    %91 = tpu.matmul %89, %90, %cst_55 {dimension_numbers = #tpu.dot_dimension_numbers<[1], [0], [0], [1], [0, 0, 1, 1], [], []>} : vector<8x8xbf16>, vector<8x256xbf16>, vector<8x256xf32> -> vector<8x256xf32>
    %92 = arith.addf %83, %91 : vector<8x256xf32>
    %c16_i32_56 = arith.constant 16 : i32
    %93 = tpu.dynamic_rotate %82 by %c16_i32_56 dim 1 : vector<8x256xf32>, i32 -> vector<8x256xf32>
    %c1_57 = arith.constant 1 : index
    %c0_58 = arith.constant 0 : index
    %94 = vector.load %arg10[%c1_57, %c0_58] : memref<9x256xf32, #tpu.memory_space<vmem>>, vector<1x256xf32>
    %95 = vector.broadcast %94 : vector<1x256xf32> to vector<8x256xf32>
    %96 = arith.mulf %93, %95 : vector<8x256xf32>
    %c1_59 = arith.constant 1 : index
    %c0_60 = arith.constant 0 : index
    %c0_61 = arith.constant 0 : index
    %97 = vector.load %arg4[%c1_59, %c0_60, %c0_61] : memref<9x8x8xbf16, #tpu.memory_space<vmem>>, vector<1x8x8xbf16>
    %98 = vector.shape_cast %97 : vector<1x8x8xbf16> to vector<8x8xbf16>
    %99 = arith.truncf %96 : vector<8x256xf32> to vector<8x256xbf16>
    %cst_62 = arith.constant dense<0.000000e+00> : vector<8x256xf32>
    %100 = tpu.matmul %98, %99, %cst_62 {dimension_numbers = #tpu.dot_dimension_numbers<[1], [0], [0], [1], [0, 0, 1, 1], [], []>} : vector<8x8xbf16>, vector<8x256xbf16>, vector<8x256xf32> -> vector<8x256xf32>
    %101 = arith.addf %92, %100 : vector<8x256xf32>
    %c15_i32_63 = arith.constant 15 : i32
    %102 = tpu.dynamic_rotate %82 by %c15_i32_63 dim 1 : vector<8x256xf32>, i32 -> vector<8x256xf32>
    %c2_64 = arith.constant 2 : index
    %c0_65 = arith.constant 0 : index
    %103 = vector.load %arg10[%c2_64, %c0_65] : memref<9x256xf32, #tpu.memory_space<vmem>>, vector<1x256xf32>
    %104 = vector.broadcast %103 : vector<1x256xf32> to vector<8x256xf32>
    %105 = arith.mulf %102, %104 : vector<8x256xf32>
    %c2_66 = arith.constant 2 : index
    %c0_67 = arith.constant 0 : index
    %c0_68 = arith.constant 0 : index
    %106 = vector.load %arg4[%c2_66, %c0_67, %c0_68] : memref<9x8x8xbf16, #tpu.memory_space<vmem>>, vector<1x8x8xbf16>
    %107 = vector.shape_cast %106 : vector<1x8x8xbf16> to vector<8x8xbf16>
    %108 = arith.truncf %105 : vector<8x256xf32> to vector<8x256xbf16>
    %cst_69 = arith.constant dense<0.000000e+00> : vector<8x256xf32>
    %109 = tpu.matmul %107, %108, %cst_69 {dimension_numbers = #tpu.dot_dimension_numbers<[1], [0], [0], [1], [0, 0, 1, 1], [], []>} : vector<8x8xbf16>, vector<8x256xbf16>, vector<8x256xf32> -> vector<8x256xf32>
    %110 = arith.addf %101, %109 : vector<8x256xf32>
    %c1_i32_70 = arith.constant 1 : i32
    %111 = tpu.dynamic_rotate %82 by %c1_i32_70 dim 1 : vector<8x256xf32>, i32 -> vector<8x256xf32>
    %c3_71 = arith.constant 3 : index
    %c0_72 = arith.constant 0 : index
    %112 = vector.load %arg10[%c3_71, %c0_72] : memref<9x256xf32, #tpu.memory_space<vmem>>, vector<1x256xf32>
    %113 = vector.broadcast %112 : vector<1x256xf32> to vector<8x256xf32>
    %114 = arith.mulf %111, %113 : vector<8x256xf32>
    %c3_73 = arith.constant 3 : index
    %c0_74 = arith.constant 0 : index
    %c0_75 = arith.constant 0 : index
    %115 = vector.load %arg4[%c3_73, %c0_74, %c0_75] : memref<9x8x8xbf16, #tpu.memory_space<vmem>>, vector<1x8x8xbf16>
    %116 = vector.shape_cast %115 : vector<1x8x8xbf16> to vector<8x8xbf16>
    %117 = arith.truncf %114 : vector<8x256xf32> to vector<8x256xbf16>
    %cst_76 = arith.constant dense<0.000000e+00> : vector<8x256xf32>
    %118 = tpu.matmul %116, %117, %cst_76 {dimension_numbers = #tpu.dot_dimension_numbers<[1], [0], [0], [1], [0, 0, 1, 1], [], []>} : vector<8x8xbf16>, vector<8x256xbf16>, vector<8x256xf32> -> vector<8x256xf32>
    %119 = arith.addf %110, %118 : vector<8x256xf32>
    %c4_77 = arith.constant 4 : index
    %c0_78 = arith.constant 0 : index
    %c0_79 = arith.constant 0 : index
    %120 = vector.load %arg4[%c4_77, %c0_78, %c0_79] : memref<9x8x8xbf16, #tpu.memory_space<vmem>>, vector<1x8x8xbf16>
    %121 = vector.shape_cast %120 : vector<1x8x8xbf16> to vector<8x8xbf16>
    %122 = arith.truncf %82 : vector<8x256xf32> to vector<8x256xbf16>
    %cst_80 = arith.constant dense<0.000000e+00> : vector<8x256xf32>
    %123 = tpu.matmul %121, %122, %cst_80 {dimension_numbers = #tpu.dot_dimension_numbers<[1], [0], [0], [1], [0, 0, 1, 1], [], []>} : vector<8x8xbf16>, vector<8x256xbf16>, vector<8x256xf32> -> vector<8x256xf32>
    %124 = arith.addf %119, %123 : vector<8x256xf32>
    %c255_i32_81 = arith.constant 255 : i32
    %125 = tpu.dynamic_rotate %82 by %c255_i32_81 dim 1 : vector<8x256xf32>, i32 -> vector<8x256xf32>
    %c5_82 = arith.constant 5 : index
    %c0_83 = arith.constant 0 : index
    %126 = vector.load %arg10[%c5_82, %c0_83] : memref<9x256xf32, #tpu.memory_space<vmem>>, vector<1x256xf32>
    %127 = vector.broadcast %126 : vector<1x256xf32> to vector<8x256xf32>
    %128 = arith.mulf %125, %127 : vector<8x256xf32>
    %c5_84 = arith.constant 5 : index
    %c0_85 = arith.constant 0 : index
    %c0_86 = arith.constant 0 : index
    %129 = vector.load %arg4[%c5_84, %c0_85, %c0_86] : memref<9x8x8xbf16, #tpu.memory_space<vmem>>, vector<1x8x8xbf16>
    %130 = vector.shape_cast %129 : vector<1x8x8xbf16> to vector<8x8xbf16>
    %131 = arith.truncf %128 : vector<8x256xf32> to vector<8x256xbf16>
    %cst_87 = arith.constant dense<0.000000e+00> : vector<8x256xf32>
    %132 = tpu.matmul %130, %131, %cst_87 {dimension_numbers = #tpu.dot_dimension_numbers<[1], [0], [0], [1], [0, 0, 1, 1], [], []>} : vector<8x8xbf16>, vector<8x256xbf16>, vector<8x256xf32> -> vector<8x256xf32>
    %133 = arith.addf %124, %132 : vector<8x256xf32>
    %c241_i32_88 = arith.constant 241 : i32
    %134 = tpu.dynamic_rotate %82 by %c241_i32_88 dim 1 : vector<8x256xf32>, i32 -> vector<8x256xf32>
    %c6_89 = arith.constant 6 : index
    %c0_90 = arith.constant 0 : index
    %135 = vector.load %arg10[%c6_89, %c0_90] : memref<9x256xf32, #tpu.memory_space<vmem>>, vector<1x256xf32>
    %136 = vector.broadcast %135 : vector<1x256xf32> to vector<8x256xf32>
    %137 = arith.mulf %134, %136 : vector<8x256xf32>
    %c6_91 = arith.constant 6 : index
    %c0_92 = arith.constant 0 : index
    %c0_93 = arith.constant 0 : index
    %138 = vector.load %arg4[%c6_91, %c0_92, %c0_93] : memref<9x8x8xbf16, #tpu.memory_space<vmem>>, vector<1x8x8xbf16>
    %139 = vector.shape_cast %138 : vector<1x8x8xbf16> to vector<8x8xbf16>
    %140 = arith.truncf %137 : vector<8x256xf32> to vector<8x256xbf16>
    %cst_94 = arith.constant dense<0.000000e+00> : vector<8x256xf32>
    %141 = tpu.matmul %139, %140, %cst_94 {dimension_numbers = #tpu.dot_dimension_numbers<[1], [0], [0], [1], [0, 0, 1, 1], [], []>} : vector<8x8xbf16>, vector<8x256xbf16>, vector<8x256xf32> -> vector<8x256xf32>
    %142 = arith.addf %133, %141 : vector<8x256xf32>
    %c240_i32_95 = arith.constant 240 : i32
    %143 = tpu.dynamic_rotate %82 by %c240_i32_95 dim 1 : vector<8x256xf32>, i32 -> vector<8x256xf32>
    %c7_96 = arith.constant 7 : index
    %c0_97 = arith.constant 0 : index
    %144 = vector.load %arg10[%c7_96, %c0_97] : memref<9x256xf32, #tpu.memory_space<vmem>>, vector<1x256xf32>
    %145 = vector.broadcast %144 : vector<1x256xf32> to vector<8x256xf32>
    %146 = arith.mulf %143, %145 : vector<8x256xf32>
    %c7_98 = arith.constant 7 : index
    %c0_99 = arith.constant 0 : index
    %c0_100 = arith.constant 0 : index
    %147 = vector.load %arg4[%c7_98, %c0_99, %c0_100] : memref<9x8x8xbf16, #tpu.memory_space<vmem>>, vector<1x8x8xbf16>
    %148 = vector.shape_cast %147 : vector<1x8x8xbf16> to vector<8x8xbf16>
    %149 = arith.truncf %146 : vector<8x256xf32> to vector<8x256xbf16>
    %cst_101 = arith.constant dense<0.000000e+00> : vector<8x256xf32>
    %150 = tpu.matmul %148, %149, %cst_101 {dimension_numbers = #tpu.dot_dimension_numbers<[1], [0], [0], [1], [0, 0, 1, 1], [], []>} : vector<8x8xbf16>, vector<8x256xbf16>, vector<8x256xf32> -> vector<8x256xf32>
    %151 = arith.addf %142, %150 : vector<8x256xf32>
    %c239_i32_102 = arith.constant 239 : i32
    %152 = tpu.dynamic_rotate %82 by %c239_i32_102 dim 1 : vector<8x256xf32>, i32 -> vector<8x256xf32>
    %c8_103 = arith.constant 8 : index
    %c0_104 = arith.constant 0 : index
    %153 = vector.load %arg10[%c8_103, %c0_104] : memref<9x256xf32, #tpu.memory_space<vmem>>, vector<1x256xf32>
    %154 = vector.broadcast %153 : vector<1x256xf32> to vector<8x256xf32>
    %155 = arith.mulf %152, %154 : vector<8x256xf32>
    %c8_105 = arith.constant 8 : index
    %c0_106 = arith.constant 0 : index
    %c0_107 = arith.constant 0 : index
    %156 = vector.load %arg4[%c8_105, %c0_106, %c0_107] : memref<9x8x8xbf16, #tpu.memory_space<vmem>>, vector<1x8x8xbf16>
    %157 = vector.shape_cast %156 : vector<1x8x8xbf16> to vector<8x8xbf16>
    %158 = arith.truncf %155 : vector<8x256xf32> to vector<8x256xbf16>
    %cst_108 = arith.constant dense<0.000000e+00> : vector<8x256xf32>
    %159 = tpu.matmul %157, %158, %cst_108 {dimension_numbers = #tpu.dot_dimension_numbers<[1], [0], [0], [1], [0, 0, 1, 1], [], []>} : vector<8x8xbf16>, vector<8x256xbf16>, vector<8x256xf32> -> vector<8x256xf32>
    %160 = arith.addf %151, %159 : vector<8x256xf32>
    %c0_109 = arith.constant 0 : index
    %c0_110 = arith.constant 0 : index
    %161 = vector.load %arg5[%c0_109, %c0_110] : memref<8x1xf32, #tpu.memory_space<vmem>>, vector<8x1xf32>
    %162 = vector.broadcast %161 : vector<8x1xf32> to vector<8x256xf32>
    %163 = arith.addf %160, %162 : vector<8x256xf32>
    %cst_111 = arith.constant dense<0.000000e+00> : vector<8xf32>
    %164 = vector.multi_reduction <add>, %163, %cst_111 [1] : vector<8x256xf32> to vector<8xf32>
    %165 = vector.shape_cast %164 : vector<8xf32> to vector<8x1xf32>
    %cst_112 = arith.constant 3.906250e-03 : f32
    %166 = vector.broadcast %cst_112 : f32 to vector<8x1xf32>
    %167 = arith.mulf %165, %166 : vector<8x1xf32>
    %c0_113 = arith.constant 0 : index
    %c0_114 = arith.constant 0 : index
    %168 = vector.load %arg6[%c0_113, %c0_114] : memref<2x8xf32, #tpu.memory_space<vmem>>, vector<2x8xf32>
    %cst_115 = arith.constant dense<0.000000e+00> : vector<2x1xf32>
    %169 = tpu.matmul %168, %167, %cst_115 {dimension_numbers = #tpu.dot_dimension_numbers<[1], [0], [0], [1], [0, 0, 1, 1], [], []>} : vector<2x8xf32>, vector<8x1xf32>, vector<2x1xf32> -> vector<2x1xf32>
    %c0_116 = arith.constant 0 : index
    %c0_117 = arith.constant 0 : index
    %170 = vector.load %arg7[%c0_116, %c0_117] : memref<2x1xf32, #tpu.memory_space<vmem>>, vector<2x1xf32>
    %171 = arith.addf %169, %170 : vector<2x1xf32>
    %cst_118 = arith.constant 0.000000e+00 : f32
    %172 = vector.broadcast %cst_118 : f32 to vector<2x1xf32>
    %173 = arith.maximumf %171, %172 : vector<2x1xf32>
    %c0_119 = arith.constant 0 : index
    %c0_120 = arith.constant 0 : index
    %174 = vector.load %arg8[%c0_119, %c0_120] : memref<16x2xf32, #tpu.memory_space<vmem>>, vector<16x2xf32>
    %cst_121 = arith.constant dense<0.000000e+00> : vector<16x1xf32>
    %175 = tpu.matmul %174, %173, %cst_121 {dimension_numbers = #tpu.dot_dimension_numbers<[1], [0], [0], [1], [0, 0, 1, 1], [], []>} : vector<16x2xf32>, vector<2x1xf32>, vector<16x1xf32> -> vector<16x1xf32>
    %c0_122 = arith.constant 0 : index
    %c0_123 = arith.constant 0 : index
    %176 = vector.load %arg9[%c0_122, %c0_123] : memref<16x1xf32, #tpu.memory_space<vmem>>, vector<16x1xf32>
    %177 = arith.addf %175, %176 : vector<16x1xf32>
    %178 = vector.extract_strided_slice %177 {offsets = [0, 0], sizes = [8, 1], strides = [1, 1]} : vector<16x1xf32> to vector<8x1xf32>
    %179 = arith.negf %178 : vector<8x1xf32>
    %180 = math.exp %179 : vector<8x1xf32>
    %cst_124 = arith.constant 1.000000e+00 : f32
    %181 = vector.broadcast %cst_124 : f32 to vector<8x1xf32>
    %182 = arith.addf %181, %180 : vector<8x1xf32>
    %183 = arith.divf %181, %182 : vector<8x1xf32>
    %cst_125 = arith.constant 1.000000e+00 : f32
    %184 = vector.broadcast %cst_125 : f32 to vector<8x1xf32>
    %185 = arith.addf %183, %184 : vector<8x1xf32>
    %186 = vector.extract_strided_slice %177 {offsets = [8, 0], sizes = [8, 1], strides = [1, 1]} : vector<16x1xf32> to vector<8x1xf32>
    %187 = vector.broadcast %185 : vector<8x1xf32> to vector<8x256xf32>
    %188 = arith.mulf %1, %187 : vector<8x256xf32>
    %189 = vector.broadcast %186 : vector<8x1xf32> to vector<8x256xf32>
    %190 = arith.addf %188, %189 : vector<8x256xf32>
    %cst_126 = arith.constant 0.000000e+00 : f32
    %191 = vector.broadcast %cst_126 : f32 to vector<8x256xf32>
    %192 = arith.maximumf %190, %191 : vector<8x256xf32>
    %c0_127 = arith.constant 0 : index
    %c0_128 = arith.constant 0 : index
    %c0_129 = arith.constant 0 : index
    %193 = vector.load %arg11[%c0_127, %c0_128, %c0_129] : memref<1x8x256xf32, #tpu.memory_space<vmem>>, vector<1x8x256xf32>
    %194 = vector.shape_cast %193 : vector<1x8x256xf32> to vector<8x256xf32>
    %195 = vector.shape_cast %192 : vector<8x256xf32> to vector<1x8x256xf32>
    tpu.vector_store %arg11[%c0_127, %c0_128, %c0_129], %195 {strides = array<i32>} : memref<1x8x256xf32, #tpu.memory_space<vmem>>, vector<1x8x256xf32>,
    return
  }
  func.func @transform_0(%arg0: i32) -> (i32, i32, i32) {
    %c0_i32 = arith.constant 0 : i32
    %c0_i32_0 = arith.constant 0 : i32
    %c0_i32_1 = arith.constant 0 : i32
    return %arg0, %c0_i32, %c0_i32_0 : i32, i32, i32
  }
  func.func @transform_1(%arg0: i32) -> (i32, i32, i32) {
    %c0_i32 = arith.constant 0 : i32
    %c0_i32_0 = arith.constant 0 : i32
    %c0_i32_1 = arith.constant 0 : i32
    %c0_i32_2 = arith.constant 0 : i32
    return %c0_i32, %c0_i32_0, %c0_i32_1 : i32, i32, i32
  }
  func.func @transform_2(%arg0: i32) -> (i32, i32) {
    %c0_i32 = arith.constant 0 : i32
    %c0_i32_0 = arith.constant 0 : i32
    %c0_i32_1 = arith.constant 0 : i32
    return %c0_i32, %c0_i32_0 : i32, i32
  }
  func.func @transform_3(%arg0: i32) -> (i32, i32, i32) {
    %c0_i32 = arith.constant 0 : i32
    %c0_i32_0 = arith.constant 0 : i32
    %c0_i32_1 = arith.constant 0 : i32
    %c0_i32_2 = arith.constant 0 : i32
    return %c0_i32, %c0_i32_0, %c0_i32_1 : i32, i32, i32
  }
  func.func @transform_4(%arg0: i32) -> (i32, i32) {
    %c0_i32 = arith.constant 0 : i32
    %c0_i32_0 = arith.constant 0 : i32
    %c0_i32_1 = arith.constant 0 : i32
    return %c0_i32, %c0_i32_0 : i32, i32
  }
  func.func @transform_5(%arg0: i32) -> (i32, i32) {
    %c0_i32 = arith.constant 0 : i32
    %c0_i32_0 = arith.constant 0 : i32
    %c0_i32_1 = arith.constant 0 : i32
    return %c0_i32, %c0_i32_0 : i32, i32
  }
  func.func @transform_6(%arg0: i32) -> (i32, i32) {
    %c0_i32 = arith.constant 0 : i32
    %c0_i32_0 = arith.constant 0 : i32
    %c0_i32_1 = arith.constant 0 : i32
    return %c0_i32, %c0_i32_0 : i32, i32
  }
  func.func @transform_7(%arg0: i32) -> (i32, i32) {
    %c0_i32 = arith.constant 0 : i32
    %c0_i32_0 = arith.constant 0 : i32
    %c0_i32_1 = arith.constant 0 : i32
    return %c0_i32, %c0_i32_0 : i32, i32
  }
  func.func @transform_8(%arg0: i32) -> (i32, i32) {
    %c0_i32 = arith.constant 0 : i32
    %c0_i32_0 = arith.constant 0 : i32
    %c0_i32_1 = arith.constant 0 : i32
    return %c0_i32, %c0_i32_0 : i32, i32
  }
  func.func @transform_9(%arg0: i32) -> (i32, i32) {
    %c0_i32 = arith.constant 0 : i32
    %c0_i32_0 = arith.constant 0 : i32
    %c0_i32_1 = arith.constant 0 : i32
    return %c0_i32, %c0_i32_0 : i32, i32
  }
  func.func @transform_10(%arg0: i32) -> (i32, i32, i32) {
    %c0_i32 = arith.constant 0 : i32
    %c0_i32_0 = arith.constant 0 : i32
    %c0_i32_1 = arith.constant 0 : i32
    return %arg0, %c0_i32, %c0_i32_0 : i32, i32, i32
  }
}

</mosaic_0001>

<llo_original>
// kernel: tpu_custom_call.1
$region0: #{tpu_custom_call.1}
  #allocation0 [shape = 'u32[]', space=smem, size = 0x4, offset = 0x4, fixed_abs, tag = 'smem constant byte address 0x4 - core index']
  #allocation1 [shape = 'u32[144,128]{1,0:T(1,128)}', space=vmem, size = 0x12000, scoped, tag = 'internal scratch']
  %s0 = inlined_call_operand.vmem [shape: f32[2,8,256], index: 0, kind: input, shape index: {}]
  %s1 = inlined_call_operand.vmem [shape: bf16[9,8,8], index: 1, kind: input, shape index: {}]
  %s2 = inlined_call_operand.vmem [shape: f32[8,1], index: 2, kind: input, shape index: {}]
  %s3 = inlined_call_operand.vmem [shape: bf16[9,8,8], index: 3, kind: input, shape index: {}]
  %s4 = inlined_call_operand.vmem [shape: f32[8,1], index: 4, kind: input, shape index: {}]
  %s5 = inlined_call_operand.vmem [shape: f32[2,8], index: 5, kind: input, shape index: {}]
  %s6 = inlined_call_operand.vmem [shape: f32[2,1], index: 6, kind: input, shape index: {}]
  %s7 = inlined_call_operand.vmem [shape: f32[16,2], index: 7, kind: input, shape index: {}]
  %s8 = inlined_call_operand.vmem [shape: f32[16,1], index: 8, kind: input, shape index: {}]
  %s9 = inlined_call_operand.vmem [shape: f32[9,256], index: 9, kind: input, shape index: {}]
  %s10 = inlined_call_operand.hbm [shape: f32[2,8,256], index: 10, kind: output, shape index: {}]
  %s11 = sld [smem:[#allocation0]]
  $region73: #{tpu_custom_call.1} parent=0
    _
  %s13 = ssub.s32 1, %s11
  %s14 = scalar_select 0, %s13, %s11
  $region1: #{tpu_custom_call.1} parent=0
    #allocation2 [shape = 'u8[16384]{0}', space=vmem, size = 0x4000, scoped, tag = 'output window, operand 0']
    #allocation3 [shape = 's32[2]{0}', space=sflag, size = 0x8, scoped, tag = 'scoped memory for tpu_custom_call.1']
    %15 = vsyncpa [#allocation3], 0
    %s16 = scalar_lea.sflag [#allocation3], 1
    %17 = vsyncpa %s16, 0
    loop: start=0, step=1, limit=4
    $region2: #{tpu_custom_call.1} parent=1 // loop_pre_header
      _
    $region3: #{tpu_custom_call.1} parent=1 // loop_header
      %s19 = sphi 0, %s23
      %p20 = scmp.ge.s32.totalorder %s19, 4
      %s29 = sphi 0, %s31
      %s32 = sphi 0, %s29
      %s33 = sphi 0, %s32
      %s49 = sphi 0, %s33
      %s53 = sphi 0, %s53
      %s55 = sphi 0, %s53
      %s56 = sphi 0, %s55
      %s70 = sphi 0, %s56
      %s74 = sphi 0, %s74
      %s76 = sphi 0, %s74
      %s77 = sphi 0, %s76
      %s91 = sphi 0, %s77
      %s95 = sphi 0, %s95
      %s97 = sphi 0, %s95
      %s98 = sphi 0, %s97
      %s112 = sphi 0, %s98
      %s116 = sphi 0, %s116
      %s118 = sphi 0, %s116
      %s119 = sphi 0, %s118
      %s133 = sphi 0, %s119
      %s137 = sphi 0, %s137
      %s139 = sphi 0, %s137
      %s140 = sphi 0, %s139
      %s154 = sphi 0, %s140
      %s158 = sphi 0, %s158
      %s160 = sphi 0, %s158
      %s161 = sphi 0, %s160
      %s175 = sphi 0, %s161
      %s179 = sphi 0, %s179
      %s181 = sphi 0, %s179
      %s182 = sphi 0, %s181
      %s196 = sphi 0, %s182
      %s200 = sphi 0, %s200
      %s202 = sphi 0, %s200
      %s203 = sphi 0, %s202
      %s217 = sphi 0, %s203
      %s221 = sphi 0, %s221
      %s223 = sphi 0, %s221
      %s224 = sphi 0, %s223
      %s238 = sphi 0, %s224
      %s244 = sphi 0, %s246
      %s247 = sphi 0, %s244
      %s248 = sphi 0, %s247
      %s264 = sphi 0, %s248
    $region4: #{tpu_custom_call.1} parent=1 // loop_header_branch
      %22 = sbr.rel (%p20) target = $region8
    $region5: #{tpu_custom_call.1} parent=1 // loop_body
      %s24 = ssub.s32 %s19, 1
      %s25 = ssub.s32 %s19, 2
      %s26 = sadd.s32 %s19, 1
      %s27 = ssub.s32 %s19, %s26
      %p28 = scmp.eq.s32.totalorder %s27, 0
      %s30 = sadd.s32 %s29, 1
      %s31 = scalar_select %p28, %s29, %s30
      %p34 = pneg %p28
      %p35 = scmp.eq.s32.totalorder %s19, 1
      %p36 = por %p34, %p35
      %p37 = scmp.ne.s32.totalorder %s29, %s32
      %p38 = scmp.eq.s32.totalorder %s19, 0
      %p39 = por %p37, %p38
      %p40 = scmp.ne.s32.totalorder %s29, %s32
      %p41 = scmp.eq.s32.totalorder %s24, 1
      %p42 = por %p40, %p41
      %p43 = scmp.ne.s32.totalorder %s32, %s33
      %p44 = scmp.eq.s32.totalorder %s24, 0
      %p45 = por %p43, %p44
      %p46 = scmp.ne.s32.totalorder %s32, %s33
      %p47 = scmp.eq.s32.totalorder %s25, 1
      %p48 = por %p46, %p47
      %p50 = scmp.ne.s32.totalorder %s33, %s49
      %p51 = scmp.eq.s32.totalorder %s25, 0
      %p52 = por %p50, %p51
      %s54 = sadd.s32 %s53, 1
      %p57 = scmp.eq.s32.totalorder %s19, 1
      %p58 = scmp.ne.s32.totalorder %s53, %s55
      %p59 = scmp.eq.s32.totalorder %s19, 0
      %p60 = por %p58, %p59
      %p61 = scmp.ne.s32.totalorder %s53, %s55
      %p62 = scmp.eq.s32.totalorder %s24, 1
      %p63 = por %p61, %p62
      %p64 = scmp.ne.s32.totalorder %s55, %s56
      %p65 = scmp.eq.s32.totalorder %s24, 0
      %p66 = por %p64, %p65
      %p67 = scmp.ne.s32.totalorder %s55, %s56
      %p68 = scmp.eq.s32.totalorder %s25, 1
      %p69 = por %p67, %p68
      %p71 = scmp.ne.s32.totalorder %s56, %s70
      %p72 = scmp.eq.s32.totalorder %s25, 0
      %p73 = por %p71, %p72
      %s75 = sadd.s32 %s74, 1
      %p78 = scmp.eq.s32.totalorder %s19, 1
      %p79 = scmp.ne.s32.totalorder %s74, %s76
      %p80 = scmp.eq.s32.totalorder %s19, 0
      %p81 = por %p79, %p80
      %p82 = scmp.ne.s32.totalorder %s74, %s76
      %p83 = scmp.eq.s32.totalorder %s24, 1
      %p84 = por %p82, %p83
      %p85 = scmp.ne.s32.totalorder %s76, %s77
      %p86 = scmp.eq.s32.totalorder %s24, 0
      %p87 = por %p85, %p86
      %p88 = scmp.ne.s32.totalorder %s76, %s77
      %p89 = scmp.eq.s32.totalorder %s25, 1
      %p90 = por %p88, %p89
      %p92 = scmp.ne.s32.totalorder %s77, %s91
      %p93 = scmp.eq.s32.totalorder %s25, 0
      %p94 = por %p92, %p93
      %s96 = sadd.s32 %s95, 1
      %p99 = scmp.eq.s32.totalorder %s19, 1
      %p100 = scmp.ne.s32.totalorder %s95, %s97
      %p101 = scmp.eq.s32.totalorder %s19, 0
      %p102 = por %p100, %p101
      %p103 = scmp.ne.s32.totalorder %s95, %s97
      %p104 = scmp.eq.s32.totalorder %s24, 1
      %p105 = por %p103, %p104
      %p106 = scmp.ne.s32.totalorder %s97, %s98
      %p107 = scmp.eq.s32.totalorder %s24, 0
      %p108 = por %p106, %p107
      %p109 = scmp.ne.s32.totalorder %s97, %s98
      %p110 = scmp.eq.s32.totalorder %s25, 1
      %p111 = por %p109, %p110
      %p113 = scmp.ne.s32.totalorder %s98, %s112
      %p114 = scmp.eq.s32.totalorder %s25, 0
      %p115 = por %p113, %p114
      %s117 = sadd.s32 %s116, 1
      %p120 = scmp.eq.s32.totalorder %s19, 1
      %p121 = scmp.ne.s32.totalorder %s116, %s118
      %p122 = scmp.eq.s32.totalorder %s19, 0
      %p123 = por %p121, %p122
      %p124 = scmp.ne.s32.totalorder %s116, %s118
      %p125 = scmp.eq.s32.totalorder %s24, 1
      %p126 = por %p124, %p125
      %p127 = scmp.ne.s32.totalorder %s118, %s119
      %p128 = scmp.eq.s32.totalorder %s24, 0
      %p129 = por %p127, %p128
      %p130 = scmp.ne.s32.totalorder %s118, %s119
      %p131 = scmp.eq.s32.totalorder %s25, 1
      %p132 = por %p130, %p131
      %p134 = scmp.ne.s32.totalorder %s119, %s133
      %p135 = scmp.eq.s32.totalorder %s25, 0
      %p136 = por %p134, %p135
      %s138 = sadd.s32 %s137, 1
      %p141 = scmp.eq.s32.totalorder %s19, 1
      %p142 = scmp.ne.s32.totalorder %s137, %s139
      %p143 = scmp.eq.s32.totalorder %s19, 0
      %p144 = por %p142, %p143
      %p145 = scmp.ne.s32.totalorder %s137, %s139
      %p146 = scmp.eq.s32.totalorder %s24, 1
      %p147 = por %p145, %p146
      %p148 = scmp.ne.s32.totalorder %s139, %s140
      %p149 = scmp.eq.s32.totalorder %s24, 0
      %p150 = por %p148, %p149
      %p151 = scmp.ne.s32.totalorder %s139, %s140
      %p152 = scmp.eq.s32.totalorder %s25, 1
      %p153 = por %p151, %p152
      %p155 = scmp.ne.s32.totalorder %s140, %s154
      %p156 = scmp.eq.s32.totalorder %s25, 0
      %p157 = por %p155, %p156
      %s159 = sadd.s32 %s158, 1
      %p162 = scmp.eq.s32.totalorder %s19, 1
      %p163 = scmp.ne.s32.totalorder %s158, %s160
      %p164 = scmp.eq.s32.totalorder %s19, 0
      %p165 = por %p163, %p164
      %p166 = scmp.ne.s32.totalorder %s158, %s160
      %p167 = scmp.eq.s32.totalorder %s24, 1
      %p168 = por %p166, %p167
      %p169 = scmp.ne.s32.totalorder %s160, %s161
      %p170 = scmp.eq.s32.totalorder %s24, 0
      %p171 = por %p169, %p170
      %p172 = scmp.ne.s32.totalorder %s160, %s161
      %p173 = scmp.eq.s32.totalorder %s25, 1
      %p174 = por %p172, %p173
      %p176 = scmp.ne.s32.totalorder %s161, %s175
      %p177 = scmp.eq.s32.totalorder %s25, 0
      %p178 = por %p176, %p177
      %s180 = sadd.s32 %s179, 1
      %p183 = scmp.eq.s32.totalorder %s19, 1
      %p184 = scmp.ne.s32.totalorder %s179, %s181
      %p185 = scmp.eq.s32.totalorder %s19, 0
      %p186 = por %p184, %p185
      %p187 = scmp.ne.s32.totalorder %s179, %s181
      %p188 = scmp.eq.s32.totalorder %s24, 1
      %p189 = por %p187, %p188
      %p190 = scmp.ne.s32.totalorder %s181, %s182
      %p191 = scmp.eq.s32.totalorder %s24, 0
      %p192 = por %p190, %p191
      %p193 = scmp.ne.s32.totalorder %s181, %s182
      %p194 = scmp.eq.s32.totalorder %s25, 1
      %p195 = por %p193, %p194
      %p197 = scmp.ne.s32.totalorder %s182, %s196
      %p198 = scmp.eq.s32.totalorder %s25, 0
      %p199 = por %p197, %p198
      %s201 = sadd.s32 %s200, 1
      %p204 = scmp.eq.s32.totalorder %s19, 1
      %p205 = scmp.ne.s32.totalorder %s200, %s202
      %p206 = scmp.eq.s32.totalorder %s19, 0
      %p207 = por %p205, %p206
      %p208 = scmp.ne.s32.totalorder %s200, %s202
      %p209 = scmp.eq.s32.totalorder %s24, 1
      %p210 = por %p208, %p209
      %p211 = scmp.ne.s32.totalorder %s202, %s203
      %p212 = scmp.eq.s32.totalorder %s24, 0
      %p213 = por %p211, %p212
      %p214 = scmp.ne.s32.totalorder %s202, %s203
      %p215 = scmp.eq.s32.totalorder %s25, 1
      %p216 = por %p214, %p215
      %p218 = scmp.ne.s32.totalorder %s203, %s217
      %p219 = scmp.eq.s32.totalorder %s25, 0
      %p220 = por %p218, %p219
      %s222 = sadd.s32 %s221, 1
      %p225 = scmp.eq.s32.totalorder %s19, 1
      %p226 = scmp.ne.s32.totalorder %s221, %s223
      %p227 = scmp.eq.s32.totalorder %s19, 0
      %p228 = por %p226, %p227
      %p229 = scmp.ne.s32.totalorder %s221, %s223
      %p230 = scmp.eq.s32.totalorder %s24, 1
      %p231 = por %p229, %p230
      %p232 = scmp.ne.s32.totalorder %s223, %s224
      %p233 = scmp.eq.s32.totalorder %s24, 0
      %p234 = por %p232, %p233
      %p235 = scmp.ne.s32.totalorder %s223, %s224
      %p236 = scmp.eq.s32.totalorder %s25, 1
      %p237 = por %p235, %p236
      %p239 = scmp.ne.s32.totalorder %s224, %s238
      %p240 = scmp.eq.s32.totalorder %s25, 0
      %p241 = por %p239, %p240
      %s242 = ssub.s32 %s19, %s26
      %p243 = scmp.eq.s32.totalorder %s242, 0
      %s245 = sadd.s32 %s244, 1
      %s246 = scalar_select %p243, %s244, %s245
      %p249 = pneg %p243
      %p250 = scmp.eq.s32.totalorder %s19, 1
      %p251 = por %p249, %p250
      %p252 = scmp.ne.s32.totalorder %s244, %s247
      %p253 = scmp.eq.s32.totalorder %s19, 0
      %p254 = por %p252, %p253
      %p255 = scmp.ne.s32.totalorder %s244, %s247
      %p256 = scmp.eq.s32.totalorder %s24, 1
      %p257 = por %p255, %p256
      %p258 = scmp.ne.s32.totalorder %s247, %s248
      %p259 = scmp.eq.s32.totalorder %s24, 0
      %p260 = por %p258, %p259
      %p261 = scmp.ne.s32.totalorder %s247, %s248
      %p262 = scmp.eq.s32.totalorder %s25, 1
      %p263 = por %p261, %p262
      %p265 = scmp.ne.s32.totalorder %s248, %s264
      %p266 = scmp.eq.s32.totalorder %s25, 0
      %p267 = por %p265, %p266
      %p268 = scmp.le.s32.totalorder 1, %s19
      %p269 = scmp.lt.s32.totalorder %s19, 3
      %p270 = pnand %p268, %p269
      %p271 = pneg %p270
      // Predicated region
      $region9: #{tpu_custom_call.1} parent=5 // pred_check
        _
      $region10: #{tpu_custom_call.1} parent=5 // pred_check_branch
        %273 = sbr.rel (%p270) target = $region12
      $region11: #{tpu_custom_call.1} parent=5 // pred_region
        %s274 = ssub.s32 %s19, 1
        // Predicated region
        $region13: #{tpu_custom_call.1} parent=11 // pred_check
          %p275 = pneg %p66
        $region14: #{tpu_custom_call.1} parent=11 // pred_check_branch
          %277 = sbr.rel (%p275) target = $region16
        $region15: #{tpu_custom_call.1} parent=11 // pred_region
          _
        $region16: #{tpu_custom_call.1} parent=11 // pred_fallthru
          _
        // Predicated region
        $region17: #{tpu_custom_call.1} parent=11 // pred_check
          %p278 = pneg %p87
        $region18: #{tpu_custom_call.1} parent=11 // pred_check_branch
          %280 = sbr.rel (%p278) target = $region20
        $region19: #{tpu_custom_call.1} parent=11 // pred_region
          _
        $region20: #{tpu_custom_call.1} parent=11 // pred_fallthru
          _
        // Predicated region
        $region21: #{tpu_custom_call.1} parent=11 // pred_check
          %p281 = pneg %p108
        $region22: #{tpu_custom_call.1} parent=11 // pred_check_branch
          %283 = sbr.rel (%p281) target = $region24
        $region23: #{tpu_custom_call.1} parent=11 // pred_region
          _
        $region24: #{tpu_custom_call.1} parent=11 // pred_fallthru
          _
        // Predicated region
        $region25: #{tpu_custom_call.1} parent=11 // pred_check
          %p284 = pneg %p129
        $region26: #{tpu_custom_call.1} parent=11 // pred_check_branch
          %286 = sbr.rel (%p284) target = $region28
        $region27: #{tpu_custom_call.1} parent=11 // pred_region
          _
        $region28: #{tpu_custom_call.1} parent=11 // pred_fallthru
          _
        // Predicated region
        $region29: #{tpu_custom_call.1} parent=11 // pred_check
          %p287 = pneg %p150
        $region30: #{tpu_custom_call.1} parent=11 // pred_check_branch
          %289 = sbr.rel (%p287) target = $region32
        $region31: #{tpu_custom_call.1} parent=11 // pred_region
          _
        $region32: #{tpu_custom_call.1} parent=11 // pred_fallthru
          _
        // Predicated region
        $region33: #{tpu_custom_call.1} parent=11 // pred_check
          %p290 = pneg %p171
        $region34: #{tpu_custom_call.1} parent=11 // pred_check_branch
          %292 = sbr.rel (%p290) target = $region36
        $region35: #{tpu_custom_call.1} parent=11 // pred_region
          _
        $region36: #{tpu_custom_call.1} parent=11 // pred_fallthru
          _
        // Predicated region
        $region37: #{tpu_custom_call.1} parent=11 // pred_check
          %p293 = pneg %p192
        $region38: #{tpu_custom_call.1} parent=11 // pred_check_branch
          %295 = sbr.rel (%p293) target = $region40
        $region39: #{tpu_custom_call.1} parent=11 // pred_region
          _
        $region40: #{tpu_custom_call.1} parent=11 // pred_fallthru
          _
        // Predicated region
        $region41: #{tpu_custom_call.1} parent=11 // pred_check
          %p296 = pneg %p213
        $region42: #{tpu_custom_call.1} parent=11 // pred_check_branch
          %298 = sbr.rel (%p296) target = $region44
        $region43: #{tpu_custom_call.1} parent=11 // pred_region
          _
        $region44: #{tpu_custom_call.1} parent=11 // pred_fallthru
          _
        // Predicated region
        $region45: #{tpu_custom_call.1} parent=11 // pred_check
          %p299 = pneg %p234
        $region46: #{tpu_custom_call.1} parent=11 // pred_check_branch
          %301 = sbr.rel (%p299) target = $region48
        $region47: #{tpu_custom_call.1} parent=11 // pred_region
          _
        $region48: #{tpu_custom_call.1} parent=11 // pred_fallthru
          _
      $region12: #{tpu_custom_call.1} parent=5 // pred_fallthru
        _
      %p302 = scmp.lt.s32.totalorder %s19, 2
      // Predicated region
      $region49: #{tpu_custom_call.1} parent=5 // pred_check
        %p303 = pneg %p302
      $region50: #{tpu_custom_call.1} parent=5 // pred_check_branch
        %305 = sbr.rel (%p303) target = $region52
      $region51: #{tpu_custom_call.1} parent=5 // pred_region
        // Predicated region
        $region53: #{tpu_custom_call.1} parent=51 // pred_check
          %p306 = pneg %p39
        $region54: #{tpu_custom_call.1} parent=51 // pred_check_branch
          %308 = sbr.rel (%p306) target = $region56
        $region55: #{tpu_custom_call.1} parent=51 // pred_region
          %p309 = scmp.lt.s32.totalorder %s19, 1
          %s310 = scalar_select %p309, %s19, 1
          %s311 = smul.addr %s310, 2
          %s312 = smul.addr %s311, 8
          %s313 = scalar_lea.vmem %s0, %s312
        $region56: #{tpu_custom_call.1} parent=51 // pred_fallthru
          _
      $region52: #{tpu_custom_call.1} parent=5 // pred_fallthru
        _
      %p314 = scmp.le.s32.totalorder 1, %s19
      %p315 = scmp.lt.s32.totalorder %s19, 3
      %p316 = pnand %p314, %p315
      %p317 = pneg %p316
      // Predicated region
      $region57: #{tpu_custom_call.1} parent=5 // pred_check
        _
      $region58: #{tpu_custom_call.1} parent=5 // pred_check_branch
        %319 = sbr.rel (%p316) target = $region60
      $region59: #{tpu_custom_call.1} parent=5 // pred_region
        %s320 = ssub.s32 %s19, 1
        %p321 = scmp.lt.s32.totalorder %s24, 1
        %s322 = scalar_select %p321, %s24, 1
        %s323 = smul.addr %s322, 2
        %s324 = smul.addr %s323, 8
        %s325 = scalar_lea.vmem %s0, %s324
        %p326 = pneg %p45
        %p327 = pneg %p42
        %p328 = pneg %p66
        %p329 = pneg %p63
        %p330 = pneg %p87
        %p331 = pneg %p84
        %p332 = pneg %p108
        %p333 = pneg %p105
        %p334 = pneg %p129
        %p335 = pneg %p126
        %p336 = pneg %p150
        %p337 = pneg %p147
        %p338 = pneg %p171
        %p339 = pneg %p168
        %p340 = pneg %p192
        %p341 = pneg %p189
        %p342 = pneg %p213
        %p343 = pneg %p210
        %p344 = pneg %p234
        %p345 = pneg %p231
        %p346 = pneg %p260
        %p347 = pneg %p257
        %s348 = sand.u32 %s247, 1
        %s349 = scalar_lea.sflag [#allocation3], %s348
        %s350 = sand.u32 %s247, 1
        %s351 = smul.addr %s350, 16
        %s352 = scalar_lea.vmem [#allocation2], %s351
        %p353 = scmp.lt.s32.totalorder %s24, 1
        %s354 = scalar_select %p353, %s24, 1
        %s355 = smul.addr %s354, 2
        %s356 = smul.addr %s355, 8
        %s357 = scalar_lea.vmem %s0, %s356
        %v359 = vld [vmem:[%s357] sm:$0xff]
        %v360 = vld [vmem:[%s357 + $0x8] sm:$0xff]
        %361 = vrot.lane.b32.xlu0 %v359, 17
        %v362 = vpop.permute.xlu0 %361
        %363 = vrot.lane.b32.xlu0 %v360, 17
        %v364 = vpop.permute.xlu0 %363
        %v365 = vlaneseq
        %v366 = vand.u32 %v365, 127
        %vm367 = vcmp.lt.s32.totalorder %v366, 17
        %v368 = vsel %vm367, %v362, %v364
        %v369 = vsel %vm367, %v364, %v362
        %v370 = vld [vmem:[%s9] ss:$8 sm:$0x3]
        %v372 = vlaneseq
        %v373 = vshrl.u32 %v372, 7
        %v374 = vsub.s32 0, %v373
        %v375 = vrot.slane %v370, %v374
        %v376 = vlaneseq
        %v377 = vshrl.u32 %v376, 7
        %v378 = vsub.s32 1, %v377
        %v379 = vrot.slane %v370, %v378
        %v382 = vmul.f32 %v369, %v375
        %v383 = vmul.f32 %v368, %v379
        %v384 = vld [vmem:[%s1] sm:$0xf]
        %v385 = vpack.c.bf16 %v382, %v382
        %v386 = vpack.c.bf16 %v383, %v383
        %387 = vrot.lane.b32.xlu0 %v359, 16
        %v388 = vpop.permute.xlu0 %387
        %389 = vrot.lane.b32.xlu0 %v360, 16
        %v390 = vpop.permute.xlu0 %389
        %vm391 = vcmp.lt.s32.totalorder %v366, 16
        %v392 = vsel %vm391, %v388, %v390
        %v393 = vsel %vm391, %v390, %v388
        %s394 = scalar_lea.vmem %s9, 1
        %v395 = vld [vmem:[%s394] ss:$8 sm:$0x3]
        %v397 = vlaneseq
        %v398 = vshrl.u32 %v397, 7
        %v399 = vsub.s32 0, %v398
        %v400 = vrot.slane %v395, %v399
        %v401 = vlaneseq
        %v402 = vshrl.u32 %v401, 7
        %v403 = vsub.s32 1, %v402
        %v404 = vrot.slane %v395, %v403
        %v407 = vmul.f32 %v393, %v400
        %v408 = vmul.f32 %v392, %v404
        %s409 = scalar_lea.vmem %s1, 4
        %v410 = vld [vmem:[%s409] sm:$0xf]
        %v411 = vpack.c.bf16 %v407, %v407
        %v412 = vpack.c.bf16 %v408, %v408
        %vm413 = vcmask 64512
        %v415 = vsel %vm413, %v410, 0
        %vm417 = vcmask 1043456
        %v419 = vsel %vm417, %v411, 0
        %v422 = vsel %vm417, %v412, 0
        %424 = vmatprep.subr.bf16.mxu0 %v422
        %425 = vmatpush1.bf16.msra.mxu0 %v419
        %426 = vmatprep.subr.bf16.mxu0 0
        %427 = vmatpush1.bf16.msra.mxu0 0
        %428 = vmatprep.subr.bf16.mxu0 0
        %429 = vmatpush1.bf16.msra.mxu0 0
        %430 = vmatprep.subr.bf16.mxu0 0
        %431 = vmatpush1.bf16.msra.mxu0 0
        %432 = vmatprep.subr.bf16.mxu0 0
        %433 = vmatpush1.bf16.msra.mxu0 0
        %434 = vmatprep.subr.bf16.mxu0 0
        %435 = vmatpush1.bf16.msra.mxu0 0
        %436 = vmatprep.subr.bf16.mxu0 0
        %437 = vmatpush1.bf16.msra.mxu0 0
        %438 = vmatprep.subr.bf16.mxu0 0
        %439 = vmatpush1.bf16.msra.mxu0 0
        %440 = vmatprep.subr.bf16.mxu0 0
        %441 = vmatpush1.bf16.msra.mxu0 0
        %442 = vmatprep.subr.bf16.mxu0 0
        %443 = vmatpush1.bf16.msra.mxu0 0
        %444 = vmatprep.subr.bf16.mxu0 0
        %445 = vmatpush1.bf16.msra.mxu0 0
        %446 = vmatprep.subr.bf16.mxu0 0
        %447 = vmatpush1.bf16.msra.mxu0 0
        %448 = vmatprep.subr.bf16.mxu0 0
        %449 = vmatpush1.bf16.msra.mxu0 0
        %450 = vmatprep.subr.bf16.mxu0 0
        %451 = vmatpush1.bf16.msra.mxu0 0
        %452 = vmatprep.subr.bf16.mxu0 0
        %453 = vmatpush1.bf16.msra.mxu0 0
        %454 = vmatprep.subr.bf16.mxu0 0
        %455 = vmatpush1.bf16.msra.mxu0 0
        %456 = vmatprep.mubr.bf16.mxu0 0
        %457 = vmatmul.mubr.bf16.gmra.mrb[0].mxu0 %v415
        %v458 = vpop.f32.mrb[0].mxu0
        %v459 = vadd.f32 0.0, %v458
        %v460 = vpop.f32.mrb[0].mxu0
        %v461 = vadd.f32 0.0, %v460
        %v462 = vpop.f32.mrb[0].mxu0
        %v463 = vpop.f32.mrb[0].mxu0
        %464 = vdwg.mxu0
        %v466 = vsel %vm413, %v384, 0
        %v469 = vsel %vm417, %v385, 0
        %v472 = vsel %vm417, %v386, 0
        %474 = vmatprep.subr.bf16.mxu0 %v472
        %475 = vmatpush1.bf16.msra.mxu0 %v469
        %476 = vmatprep.subr.bf16.mxu0 0
        %477 = vmatpush1.bf16.msra.mxu0 0
        %478 = vmatprep.subr.bf16.mxu0 0
        %479 = vmatpush1.bf16.msra.mxu0 0
        %480 = vmatprep.subr.bf16.mxu0 0
        %481 = vmatpush1.bf16.msra.mxu0 0
        %482 = vmatprep.subr.bf16.mxu0 0
        %483 = vmatpush1.bf16.msra.mxu0 0
        %484 = vmatprep.subr.bf16.mxu0 0
        %485 = vmatpush1.bf16.msra.mxu0 0
        %486 = vmatprep.subr.bf16.mxu0 0
        %487 = vmatpush1.bf16.msra.mxu0 0
        %488 = vmatprep.subr.bf16.mxu0 0
        %489 = vmatpush1.bf16.msra.mxu0 0
        %490 = vmatprep.subr.bf16.mxu0 0
        %491 = vmatpush1.bf16.msra.mxu0 0
        %492 = vmatprep.subr.bf16.mxu0 0
        %493 = vmatpush1.bf16.msra.mxu0 0
        %494 = vmatprep.subr.bf16.mxu0 0
        %495 = vmatpush1.bf16.msra.mxu0 0
        %496 = vmatprep.subr.bf16.mxu0 0
        %497 = vmatpush1.bf16.msra.mxu0 0
        %498 = vmatprep.subr.bf16.mxu0 0
        %499 = vmatpush1.bf16.msra.mxu0 0
        %500 = vmatprep.subr.bf16.mxu0 0
        %501 = vmatpush1.bf16.msra.mxu0 0
        %502 = vmatprep.subr.bf16.mxu0 0
        %503 = vmatpush1.bf16.msra.mxu0 0
        %504 = vmatprep.subr.bf16.mxu0 0
        %505 = vmatpush1.bf16.msra.mxu0 0
        %506 = vmatprep.mubr.bf16.mxu0 0
        %507 = vmatmul.mubr.bf16.gmra.mrb[0].mxu0 %v466
        %v508 = vpop.f32.mrb[0].mxu0
        %v509 = vadd.f32 %v459, %v508
        %v510 = vpop.f32.mrb[0].mxu0
        %v511 = vadd.f32 %v461, %v510
        %v512 = vpop.f32.mrb[0].mxu0
        %v513 = vpop.f32.mrb[0].mxu0
        %514 = vdwg.mxu0
        %515 = vrot.lane.b32.xlu0 %v359, 15
        %v516 = vpop.permute.xlu0 %515
        %517 = vrot.lane.b32.xlu0 %v360, 15
        %v518 = vpop.permute.xlu0 %517
        %vm519 = vcmp.lt.s32.totalorder %v366, 15
        %v520 = vsel %vm519, %v516, %v518
        %v521 = vsel %vm519, %v518, %v516
        %s522 = scalar_lea.vmem %s9, 2
        %v523 = vld [vmem:[%s522] ss:$8 sm:$0x3]
        %v525 = vlaneseq
        %v526 = vshrl.u32 %v525, 7
        %v527 = vsub.s32 0, %v526
        %v528 = vrot.slane %v523, %v527
        %v529 = vlaneseq
        %v530 = vshrl.u32 %v529, 7
        %v531 = vsub.s32 1, %v530
        %v532 = vrot.slane %v523, %v531
        %v535 = vmul.f32 %v521, %v528
        %v536 = vmul.f32 %v520, %v532
        %s537 = scalar_lea.vmem %s1, 8
        %v538 = vld [vmem:[%s537] sm:$0xf]
        %v539 = vpack.c.bf16 %v535, %v535
        %v540 = vpack.c.bf16 %v536, %v536
        %v542 = vsel %vm413, %v538, 0
        %v545 = vsel %vm417, %v539, 0
        %v548 = vsel %vm417, %v540, 0
        %550 = vmatprep.subr.bf16.mxu0 %v548
        %551 = vmatpush1.bf16.msra.mxu0 %v545
        %552 = vmatprep.subr.bf16.mxu0 0
        %553 = vmatpush1.bf16.msra.mxu0 0
        %554 = vmatprep.subr.bf16.mxu0 0
        %555 = vmatpush1.bf16.msra.mxu0 0
        %556 = vmatprep.subr.bf16.mxu0 0
        %557 = vmatpush1.bf16.msra.mxu0 0
        %558 = vmatprep.subr.bf16.mxu0 0
        %559 = vmatpush1.bf16.msra.mxu0 0
        %560 = vmatprep.subr.bf16.mxu0 0
        %561 = vmatpush1.bf16.msra.mxu0 0
        %562 = vmatprep.subr.bf16.mxu0 0
        %563 = vmatpush1.bf16.msra.mxu0 0
        %564 = vmatprep.subr.bf16.mxu0 0
        %565 = vmatpush1.bf16.msra.mxu0 0
        %566 = vmatprep.subr.bf16.mxu0 0
        %567 = vmatpush1.bf16.msra.mxu0 0
        %568 = vmatprep.subr.bf16.mxu0 0
        %569 = vmatpush1.bf16.msra.mxu0 0
        %570 = vmatprep.subr.bf16.mxu0 0
        %571 = vmatpush1.bf16.msra.mxu0 0
        %572 = vmatprep.subr.bf16.mxu0 0
        %573 = vmatpush1.bf16.msra.mxu0 0
        %574 = vmatprep.subr.bf16.mxu0 0
        %575 = vmatpush1.bf16.msra.mxu0 0
        %576 = vmatprep.subr.bf16.mxu0 0
        %577 = vmatpush1.bf16.msra.mxu0 0
        %578 = vmatprep.subr.bf16.mxu0 0
        %579 = vmatpush1.bf16.msra.mxu0 0
        %580 = vmatprep.subr.bf16.mxu0 0
        %581 = vmatpush1.bf16.msra.mxu0 0
        %582 = vmatprep.mubr.bf16.mxu0 0
        %583 = vmatmul.mubr.bf16.gmra.mrb[0].mxu0 %v542
        %v584 = vpop.f32.mrb[0].mxu0
        %v585 = vadd.f32 0.0, %v584
        %v586 = vpop.f32.mrb[0].mxu0
        %v587 = vadd.f32 0.0, %v586
        %v588 = vpop.f32.mrb[0].mxu0
        %v589 = vpop.f32.mrb[0].mxu0
        %590 = vdwg.mxu0
        %v591 = vadd.f32 %v509, %v585
        %v592 = vadd.f32 %v511, %v587
        %593 = vrot.lane.b32.xlu0 %v359, 1
        %v594 = vpop.permute.xlu0 %593
        %595 = vrot.lane.b32.xlu0 %v360, 1
        %v596 = vpop.permute.xlu0 %595
        %vm597 = vcmp.lt.s32.totalorder %v366, 1
        %v598 = vsel %vm597, %v594, %v596
        %v599 = vsel %vm597, %v596, %v594
        %s600 = scalar_lea.vmem %s9, 3
        %v601 = vld [vmem:[%s600] ss:$8 sm:$0x3]
        %v603 = vlaneseq
        %v604 = vshrl.u32 %v603, 7
        %v605 = vsub.s32 0, %v604
        %v606 = vrot.slane %v601, %v605
        %v607 = vlaneseq
        %v608 = vshrl.u32 %v607, 7
        %v609 = vsub.s32 1, %v608
        %v610 = vrot.slane %v601, %v609
        %v613 = vmul.f32 %v599, %v606
        %v614 = vmul.f32 %v598, %v610
        %s615 = scalar_lea.vmem %s1, 12
        %v616 = vld [vmem:[%s615] sm:$0xf]
        %v617 = vpack.c.bf16 %v613, %v613
        %v618 = vpack.c.bf16 %v614, %v614
        %v620 = vsel %vm413, %v616, 0
        %v623 = vsel %vm417, %v617, 0
        %v626 = vsel %vm417, %v618, 0
        %628 = vmatprep.subr.bf16.mxu0 %v626
        %629 = vmatpush1.bf16.msra.mxu0 %v623
        %630 = vmatprep.subr.bf16.mxu0 0
        %631 = vmatpush1.bf16.msra.mxu0 0
        %632 = vmatprep.subr.bf16.mxu0 0
        %633 = vmatpush1.bf16.msra.mxu0 0
        %634 = vmatprep.subr.bf16.mxu0 0
        %635 = vmatpush1.bf16.msra.mxu0 0
        %636 = vmatprep.subr.bf16.mxu0 0
        %637 = vmatpush1.bf16.msra.mxu0 0
        %638 = vmatprep.subr.bf16.mxu0 0
        %639 = vmatpush1.bf16.msra.mxu0 0
        %640 = vmatprep.subr.bf16.mxu0 0
        %641 = vmatpush1.bf16.msra.mxu0 0
        %642 = vmatprep.subr.bf16.mxu0 0
        %643 = vmatpush1.bf16.msra.mxu0 0
        %644 = vmatprep.subr.bf16.mxu0 0
        %645 = vmatpush1.bf16.msra.mxu0 0
        %646 = vmatprep.subr.bf16.mxu0 0
        %647 = vmatpush1.bf16.msra.mxu0 0
        %648 = vmatprep.subr.bf16.mxu0 0
        %649 = vmatpush1.bf16.msra.mxu0 0
        %650 = vmatprep.subr.bf16.mxu0 0
        %651 = vmatpush1.bf16.msra.mxu0 0
        %652 = vmatprep.subr.bf16.mxu0 0
        %653 = vmatpush1.bf16.msra.mxu0 0
        %654 = vmatprep.subr.bf16.mxu0 0
        %655 = vmatpush1.bf16.msra.mxu0 0
        %656 = vmatprep.subr.bf16.mxu0 0
        %657 = vmatpush1.bf16.msra.mxu0 0
        %658 = vmatprep.subr.bf16.mxu0 0
        %659 = vmatpush1.bf16.msra.mxu0 0
        %660 = vmatprep.mubr.bf16.mxu0 0
        %661 = vmatmul.mubr.bf16.gmra.mrb[0].mxu0 %v620
        %v662 = vpop.f32.mrb[0].mxu0
        %v663 = vadd.f32 0.0, %v662
        %v664 = vpop.f32.mrb[0].mxu0
        %v665 = vadd.f32 0.0, %v664
        %v666 = vpop.f32.mrb[0].mxu0
        %v667 = vpop.f32.mrb[0].mxu0
        %668 = vdwg.mxu0
        %v669 = vadd.f32 %v591, %v663
        %v670 = vadd.f32 %v592, %v665
        %s671 = scalar_lea.vmem %s1, 16
        %v672 = vld [vmem:[%s671] sm:$0xf]
        %v673 = vpack.c.bf16 %v359, %v359
        %v674 = vpack.c.bf16 %v360, %v360
        %v676 = vsel %vm413, %v672, 0
        %v679 = vsel %vm417, %v673, 0
        %v682 = vsel %vm417, %v674, 0
        %684 = vmatprep.subr.bf16.mxu0 %v682
        %685 = vmatpush1.bf16.msra.mxu0 %v679
        %686 = vmatprep.subr.bf16.mxu0 0
        %687 = vmatpush1.bf16.msra.mxu0 0
        %688 = vmatprep.subr.bf16.mxu0 0
        %689 = vmatpush1.bf16.msra.mxu0 0
        %690 = vmatprep.subr.bf16.mxu0 0
        %691 = vmatpush1.bf16.msra.mxu0 0
        %692 = vmatprep.subr.bf16.mxu0 0
        %693 = vmatpush1.bf16.msra.mxu0 0
        %694 = vmatprep.subr.bf16.mxu0 0
        %695 = vmatpush1.bf16.msra.mxu0 0
        %696 = vmatprep.subr.bf16.mxu0 0
        %697 = vmatpush1.bf16.msra.mxu0 0
        %698 = vmatprep.subr.bf16.mxu0 0
        %699 = vmatpush1.bf16.msra.mxu0 0
        %700 = vmatprep.subr.bf16.mxu0 0
        %701 = vmatpush1.bf16.msra.mxu0 0
        %702 = vmatprep.subr.bf16.mxu0 0
        %703 = vmatpush1.bf16.msra.mxu0 0
        %704 = vmatprep.subr.bf16.mxu0 0
        %705 = vmatpush1.bf16.msra.mxu0 0
        %706 = vmatprep.subr.bf16.mxu0 0
        %707 = vmatpush1.bf16.msra.mxu0 0
        %708 = vmatprep.subr.bf16.mxu0 0
        %709 = vmatpush1.bf16.msra.mxu0 0
        %710 = vmatprep.subr.bf16.mxu0 0
        %711 = vmatpush1.bf16.msra.mxu0 0
        %712 = vmatprep.subr.bf16.mxu0 0
        %713 = vmatpush1.bf16.msra.mxu0 0
        %714 = vmatprep.subr.bf16.mxu0 0
        %715 = vmatpush1.bf16.msra.mxu0 0
        %716 = vmatprep.mubr.bf16.mxu0 0
        %717 = vmatmul.mubr.bf16.gmra.mrb[0].mxu0 %v676
        %v718 = vpop.f32.mrb[0].mxu0
        %v719 = vadd.f32 0.0, %v718
        %v720 = vpop.f32.mrb[0].mxu0
        %v721 = vadd.f32 0.0, %v720
        %v722 = vpop.f32.mrb[0].mxu0
        %v723 = vpop.f32.mrb[0].mxu0
        %724 = vdwg.mxu0
        %v725 = vadd.f32 %v669, %v719
        %v726 = vadd.f32 %v670, %v721
        %727 = vrot.lane.b32.xlu0 %v359, 127
        %v728 = vpop.permute.xlu0 %727
        %729 = vrot.lane.b32.xlu0 %v360, 127
        %v730 = vpop.permute.xlu0 %729
        %vm731 = vcmp.lt.s32.totalorder %v366, 127
        %v732 = vsel %vm731, %v728, %v730
        %v733 = vsel %vm731, %v730, %v728
        %s734 = scalar_lea.vmem %s9, 5
        %v735 = vld [vmem:[%s734] ss:$8 sm:$0x3]
        %v737 = vlaneseq
        %v738 = vshrl.u32 %v737, 7
        %v739 = vsub.s32 0, %v738
        %v740 = vrot.slane %v735, %v739
        %v741 = vlaneseq
        %v742 = vshrl.u32 %v741, 7
        %v743 = vsub.s32 1, %v742
        %v744 = vrot.slane %v735, %v743
        %v747 = vmul.f32 %v732, %v740
        %v748 = vmul.f32 %v733, %v744
        %s749 = scalar_lea.vmem %s1, 20
        %v750 = vld [vmem:[%s749] sm:$0xf]
        %v751 = vpack.c.bf16 %v747, %v747
        %v752 = vpack.c.bf16 %v748, %v748
        %v754 = vsel %vm413, %v750, 0
        %v757 = vsel %vm417, %v751, 0
        %v760 = vsel %vm417, %v752, 0
        %762 = vmatprep.subr.bf16.mxu0 %v760
        %763 = vmatpush1.bf16.msra.mxu0 %v757
        %764 = vmatprep.subr.bf16.mxu0 0
        %765 = vmatpush1.bf16.msra.mxu0 0
        %766 = vmatprep.subr.bf16.mxu0 0
        %767 = vmatpush1.bf16.msra.mxu0 0
        %768 = vmatprep.subr.bf16.mxu0 0
        %769 = vmatpush1.bf16.msra.mxu0 0
        %770 = vmatprep.subr.bf16.mxu0 0
        %771 = vmatpush1.bf16.msra.mxu0 0
        %772 = vmatprep.subr.bf16.mxu0 0
        %773 = vmatpush1.bf16.msra.mxu0 0
        %774 = vmatprep.subr.bf16.mxu0 0
        %775 = vmatpush1.bf16.msra.mxu0 0
        %776 = vmatprep.subr.bf16.mxu0 0
        %777 = vmatpush1.bf16.msra.mxu0 0
        %778 = vmatprep.subr.bf16.mxu0 0
        %779 = vmatpush1.bf16.msra.mxu0 0
        %780 = vmatprep.subr.bf16.mxu0 0
        %781 = vmatpush1.bf16.msra.mxu0 0
        %782 = vmatprep.subr.bf16.mxu0 0
        %783 = vmatpush1.bf16.msra.mxu0 0
        %784 = vmatprep.subr.bf16.mxu0 0
        %785 = vmatpush1.bf16.msra.mxu0 0
        %786 = vmatprep.subr.bf16.mxu0 0
        %787 = vmatpush1.bf16.msra.mxu0 0
        %788 = vmatprep.subr.bf16.mxu0 0
        %789 = vmatpush1.bf16.msra.mxu0 0
        %790 = vmatprep.subr.bf16.mxu0 0
        %791 = vmatpush1.bf16.msra.mxu0 0
        %792 = vmatprep.subr.bf16.mxu0 0
        %793 = vmatpush1.bf16.msra.mxu0 0
        %794 = vmatprep.mubr.bf16.mxu0 0
        %795 = vmatmul.mubr.bf16.gmra.mrb[0].mxu0 %v754
        %v796 = vpop.f32.mrb[0].mxu0
        %v797 = vadd.f32 0.0, %v796
        %v798 = vpop.f32.mrb[0].mxu0
        %v799 = vadd.f32 0.0, %v798
        %v800 = vpop.f32.mrb[0].mxu0
        %v801 = vpop.f32.mrb[0].mxu0
        %802 = vdwg.mxu0
        %v803 = vadd.f32 %v725, %v797
        %v804 = vadd.f32 %v726, %v799
        %805 = vrot.lane.b32.xlu0 %v359, 113
        %v806 = vpop.permute.xlu0 %805
        %807 = vrot.lane.b32.xlu0 %v360, 113
        %v808 = vpop.permute.xlu0 %807
        %vm809 = vcmp.lt.s32.totalorder %v366, 113
        %v810 = vsel %vm809, %v806, %v808
        %v811 = vsel %vm809, %v808, %v806
        %s812 = scalar_lea.vmem %s9, 6
        %v813 = vld [vmem:[%s812] ss:$8 sm:$0x3]
        %v815 = vlaneseq
        %v816 = vshrl.u32 %v815, 7
        %v817 = vsub.s32 0, %v816
        %v818 = vrot.slane %v813, %v817
        %v819 = vlaneseq
        %v820 = vshrl.u32 %v819, 7
        %v821 = vsub.s32 1, %v820
        %v822 = vrot.slane %v813, %v821
        %v825 = vmul.f32 %v810, %v818
        %v826 = vmul.f32 %v811, %v822
        %s827 = scalar_lea.vmem %s1, 24
        %v828 = vld [vmem:[%s827] sm:$0xf]
        %v829 = vpack.c.bf16 %v825, %v825
        %v830 = vpack.c.bf16 %v826, %v826
        %v832 = vsel %vm413, %v828, 0
        %v835 = vsel %vm417, %v829, 0
        %v838 = vsel %vm417, %v830, 0
        %840 = vmatprep.subr.bf16.mxu0 %v838
        %841 = vmatpush1.bf16.msra.mxu0 %v835
        %842 = vmatprep.subr.bf16.mxu0 0
        %843 = vmatpush1.bf16.msra.mxu0 0
        %844 = vmatprep.subr.bf16.mxu0 0
        %845 = vmatpush1.bf16.msra.mxu0 0
        %846 = vmatprep.subr.bf16.mxu0 0
        %847 = vmatpush1.bf16.msra.mxu0 0
        %848 = vmatprep.subr.bf16.mxu0 0
        %849 = vmatpush1.bf16.msra.mxu0 0
        %850 = vmatprep.subr.bf16.mxu0 0
        %851 = vmatpush1.bf16.msra.mxu0 0
        %852 = vmatprep.subr.bf16.mxu0 0
        %853 = vmatpush1.bf16.msra.mxu0 0
        %854 = vmatprep.subr.bf16.mxu0 0
        %855 = vmatpush1.bf16.msra.mxu0 0
        %856 = vmatprep.subr.bf16.mxu0 0
        %857 = vmatpush1.bf16.msra.mxu0 0
        %858 = vmatprep.subr.bf16.mxu0 0
        %859 = vmatpush1.bf16.msra.mxu0 0
        %860 = vmatprep.subr.bf16.mxu0 0
        %861 = vmatpush1.bf16.msra.mxu0 0
        %862 = vmatprep.subr.bf16.mxu0 0
        %863 = vmatpush1.bf16.msra.mxu0 0
        %864 = vmatprep.subr.bf16.mxu0 0
        %865 = vmatpush1.bf16.msra.mxu0 0
        %866 = vmatprep.subr.bf16.mxu0 0
        %867 = vmatpush1.bf16.msra.mxu0 0
        %868 = vmatprep.subr.bf16.mxu0 0
        %869 = vmatpush1.bf16.msra.mxu0 0
        %870 = vmatprep.subr.bf16.mxu0 0
        %871 = vmatpush1.bf16.msra.mxu0 0
        %872 = vmatprep.mubr.bf16.mxu0 0
        %873 = vmatmul.mubr.bf16.gmra.mrb[0].mxu0 %v832
        %v874 = vpop.f32.mrb[0].mxu0
        %v875 = vadd.f32 0.0, %v874
        %v876 = vpop.f32.mrb[0].mxu0
        %v877 = vadd.f32 0.0, %v876
        %v878 = vpop.f32.mrb[0].mxu0
        %v879 = vpop.f32.mrb[0].mxu0
        %880 = vdwg.mxu0
        %v881 = vadd.f32 %v803, %v875
        %v882 = vadd.f32 %v804, %v877
        %883 = vrot.lane.b32.xlu0 %v359, 112
        %v884 = vpop.permute.xlu0 %883
        %885 = vrot.lane.b32.xlu0 %v360, 112
        %v886 = vpop.permute.xlu0 %885
        %vm887 = vcmp.lt.s32.totalorder %v366, 112
        %v888 = vsel %vm887, %v884, %v886
        %v889 = vsel %vm887, %v886, %v884
        %s890 = scalar_lea.vmem %s9, 7
        %v891 = vld [vmem:[%s890] ss:$8 sm:$0x3]
        %v893 = vlaneseq
        %v894 = vshrl.u32 %v893, 7
        %v895 = vsub.s32 0, %v894
        %v896 = vrot.slane %v891, %v895
        %v897 = vlaneseq
        %v898 = vshrl.u32 %v897, 7
        %v899 = vsub.s32 1, %v898
        %v900 = vrot.slane %v891, %v899
        %v903 = vmul.f32 %v888, %v896
        %v904 = vmul.f32 %v889, %v900
        %s905 = scalar_lea.vmem %s1, 28
        %v906 = vld [vmem:[%s905] sm:$0xf]
        %v907 = vpack.c.bf16 %v903, %v903
        %v908 = vpack.c.bf16 %v904, %v904
        %v910 = vsel %vm413, %v906, 0
        %v913 = vsel %vm417, %v907, 0
        %v916 = vsel %vm417, %v908, 0
        %918 = vmatprep.subr.bf16.mxu0 %v916
        %919 = vmatpush1.bf16.msra.mxu0 %v913
        %920 = vmatprep.subr.bf16.mxu0 0
        %921 = vmatpush1.bf16.msra.mxu0 0
        %922 = vmatprep.subr.bf16.mxu0 0
        %923 = vmatpush1.bf16.msra.mxu0 0
        %924 = vmatprep.subr.bf16.mxu0 0
        %925 = vmatpush1.bf16.msra.mxu0 0
        %926 = vmatprep.subr.bf16.mxu0 0
        %927 = vmatpush1.bf16.msra.mxu0 0
        %928 = vmatprep.subr.bf16.mxu0 0
        %929 = vmatpush1.bf16.msra.mxu0 0
        %930 = vmatprep.subr.bf16.mxu0 0
        %931 = vmatpush1.bf16.msra.mxu0 0
        %932 = vmatprep.subr.bf16.mxu0 0
        %933 = vmatpush1.bf16.msra.mxu0 0
        %934 = vmatprep.subr.bf16.mxu0 0
        %935 = vmatpush1.bf16.msra.mxu0 0
        %936 = vmatprep.subr.bf16.mxu0 0
        %937 = vmatpush1.bf16.msra.mxu0 0
        %938 = vmatprep.subr.bf16.mxu0 0
        %939 = vmatpush1.bf16.msra.mxu0 0
        %940 = vmatprep.subr.bf16.mxu0 0
        %941 = vmatpush1.bf16.msra.mxu0 0
        %942 = vmatprep.subr.bf16.mxu0 0
        %943 = vmatpush1.bf16.msra.mxu0 0
        %944 = vmatprep.subr.bf16.mxu0 0
        %945 = vmatpush1.bf16.msra.mxu0 0
        %946 = vmatprep.subr.bf16.mxu0 0
        %947 = vmatpush1.bf16.msra.mxu0 0
        %948 = vmatprep.subr.bf16.mxu0 0
        %949 = vmatpush1.bf16.msra.mxu0 0
        %950 = vmatprep.mubr.bf16.mxu0 0
        %951 = vmatmul.mubr.bf16.gmra.mrb[0].mxu0 %v910
        %v952 = vpop.f32.mrb[0].mxu0
        %v953 = vadd.f32 0.0, %v952
        %v954 = vpop.f32.mrb[0].mxu0
        %v955 = vadd.f32 0.0, %v954
        %v956 = vpop.f32.mrb[0].mxu0
        %v957 = vpop.f32.mrb[0].mxu0
        %958 = vdwg.mxu0
        %v959 = vadd.f32 %v881, %v953
        %v960 = vadd.f32 %v882, %v955
        %961 = vrot.lane.b32.xlu0 %v359, 111
        %v962 = vpop.permute.xlu0 %961
        %963 = vrot.lane.b32.xlu0 %v360, 111
        %v964 = vpop.permute.xlu0 %963
        %vm965 = vcmp.lt.s32.totalorder %v366, 111
        %v966 = vsel %vm965, %v962, %v964
        %v967 = vsel %vm965, %v964, %v962
        %s968 = scalar_lea.vmem %s9, 16
        %v969 = vld [vmem:[%s968] ss:$8 sm:$0x3]
        %v971 = vlaneseq
        %v972 = vshrl.u32 %v971, 7
        %v973 = vsub.s32 0, %v972
        %v974 = vrot.slane %v969, %v973
        %v975 = vlaneseq
        %v976 = vshrl.u32 %v975, 7
        %v977 = vsub.s32 1, %v976
        %v978 = vrot.slane %v969, %v977
        %v981 = vmul.f32 %v966, %v974
        %v982 = vmul.f32 %v967, %v978
        %s983 = scalar_lea.vmem %s1, 32
        %v984 = vld [vmem:[%s983] sm:$0xf]
        %v985 = vpack.c.bf16 %v981, %v981
        %v986 = vpack.c.bf16 %v982, %v982
        %v988 = vsel %vm413, %v984, 0
        %v991 = vsel %vm417, %v985, 0
        %v994 = vsel %vm417, %v986, 0
        %996 = vmatprep.subr.bf16.mxu0 %v994
        %997 = vmatpush1.bf16.msra.mxu0 %v991
        %998 = vmatprep.subr.bf16.mxu0 0
        %999 = vmatpush1.bf16.msra.mxu0 0
        %1000 = vmatprep.subr.bf16.mxu0 0
        %1001 = vmatpush1.bf16.msra.mxu0 0
        %1002 = vmatprep.subr.bf16.mxu0 0
        %1003 = vmatpush1.bf16.msra.mxu0 0
        %1004 = vmatprep.subr.bf16.mxu0 0
        %1005 = vmatpush1.bf16.msra.mxu0 0
        %1006 = vmatprep.subr.bf16.mxu0 0
        %1007 = vmatpush1.bf16.msra.mxu0 0
        %1008 = vmatprep.subr.bf16.mxu0 0
        %1009 = vmatpush1.bf16.msra.mxu0 0
        %1010 = vmatprep.subr.bf16.mxu0 0
        %1011 = vmatpush1.bf16.msra.mxu0 0
        %1012 = vmatprep.subr.bf16.mxu0 0
        %1013 = vmatpush1.bf16.msra.mxu0 0
        %1014 = vmatprep.subr.bf16.mxu0 0
        %1015 = vmatpush1.bf16.msra.mxu0 0
        %1016 = vmatprep.subr.bf16.mxu0 0
        %1017 = vmatpush1.bf16.msra.mxu0 0
        %1018 = vmatprep.subr.bf16.mxu0 0
        %1019 = vmatpush1.bf16.msra.mxu0 0
        %1020 = vmatprep.subr.bf16.mxu0 0
        %1021 = vmatpush1.bf16.msra.mxu0 0
        %1022 = vmatprep.subr.bf16.mxu0 0
        %1023 = vmatpush1.bf16.msra.mxu0 0
        %1024 = vmatprep.subr.bf16.mxu0 0
        %1025 = vmatpush1.bf16.msra.mxu0 0
        %1026 = vmatprep.subr.bf16.mxu0 0
        %1027 = vmatpush1.bf16.msra.mxu0 0
        %1028 = vmatprep.mubr.bf16.mxu0 0
        %1029 = vmatmul.mubr.bf16.gmra.mrb[0].mxu0 %v988
        %v1030 = vpop.f32.mrb[0].mxu0
        %v1031 = vadd.f32 0.0, %v1030
        %v1032 = vpop.f32.mrb[0].mxu0
        %v1033 = vadd.f32 0.0, %v1032
        %v1034 = vpop.f32.mrb[0].mxu0
        %v1035 = vpop.f32.mrb[0].mxu0
        %1036 = vdwg.mxu0
        %v1037 = vadd.f32 %v959, %v1031
        %v1038 = vadd.f32 %v960, %v1033
        %v1039 = vld [vmem:[%s2] sm:$0xff]
        %1041 = vset.pattern.permute.xlu0 0
        %1042 = vperm.xlu0 %1041, %v1039
        %v1043 = vpop.permute.xlu0 %1042
        %v1045 = vadd.f32 %v1037, %v1043
        %v1046 = vadd.f32 %v1038, %v1043
        %1047 = vrot.lane.b32.xlu0 %v1045, 17
        %v1048 = vpop.permute.xlu0 %1047
        %1049 = vrot.lane.b32.xlu0 %v1046, 17
        %v1050 = vpop.permute.xlu0 %1049
        %v1051 = vsel %vm367, %v1048, %v1050
        %v1052 = vsel %vm367, %v1050, %v1048
        %v1053 = vmul.f32 %v1052, %v375
        %v1054 = vmul.f32 %v1051, %v379
        %v1055 = vld [vmem:[%s3] sm:$0xf]
        %v1056 = vpack.c.bf16 %v1053, %v1053
        %v1057 = vpack.c.bf16 %v1054, %v1054
        %1058 = vrot.lane.b32.xlu0 %v1045, 16
        %v1059 = vpop.permute.xlu0 %1058
        %1060 = vrot.lane.b32.xlu0 %v1046, 16
        %v1061 = vpop.permute.xlu0 %1060
        %v1062 = vsel %vm391, %v1059, %v1061
        %v1063 = vsel %vm391, %v1061, %v1059
        %v1064 = vmul.f32 %v1063, %v400
        %v1065 = vmul.f32 %v1062, %v404
        %s1066 = scalar_lea.vmem %s3, 4
        %v1067 = vld [vmem:[%s1066] sm:$0xf]
        %v1068 = vpack.c.bf16 %v1064, %v1064
        %v1069 = vpack.c.bf16 %v1065, %v1065
        %v1071 = vsel %vm413, %v1067, 0
        %v1074 = vsel %vm417, %v1068, 0
        %v1077 = vsel %vm417, %v1069, 0
        %1079 = vmatprep.subr.bf16.mxu0 %v1077
        %1080 = vmatpush1.bf16.msra.mxu0 %v1074
        %1081 = vmatprep.subr.bf16.mxu0 0
        %1082 = vmatpush1.bf16.msra.mxu0 0
        %1083 = vmatprep.subr.bf16.mxu0 0
        %1084 = vmatpush1.bf16.msra.mxu0 0
        %1085 = vmatprep.subr.bf16.mxu0 0
        %1086 = vmatpush1.bf16.msra.mxu0 0
        %1087 = vmatprep.subr.bf16.mxu0 0
        %1088 = vmatpush1.bf16.msra.mxu0 0
        %1089 = vmatprep.subr.bf16.mxu0 0
        %1090 = vmatpush1.bf16.msra.mxu0 0
        %1091 = vmatprep.subr.bf16.mxu0 0
        %1092 = vmatpush1.bf16.msra.mxu0 0
        %1093 = vmatprep.subr.bf16.mxu0 0
        %1094 = vmatpush1.bf16.msra.mxu0 0
        %1095 = vmatprep.subr.bf16.mxu0 0
        %1096 = vmatpush1.bf16.msra.mxu0 0
        %1097 = vmatprep.subr.bf16.mxu0 0
        %1098 = vmatpush1.bf16.msra.mxu0 0
        %1099 = vmatprep.subr.bf16.mxu0 0
        %1100 = vmatpush1.bf16.msra.mxu0 0
        %1101 = vmatprep.subr.bf16.mxu0 0
        %1102 = vmatpush1.bf16.msra.mxu0 0
        %1103 = vmatprep.subr.bf16.mxu0 0
        %1104 = vmatpush1.bf16.msra.mxu0 0
        %1105 = vmatprep.subr.bf16.mxu0 0
        %1106 = vmatpush1.bf16.msra.mxu0 0
        %1107 = vmatprep.subr.bf16.mxu0 0
        %1108 = vmatpush1.bf16.msra.mxu0 0
        %1109 = vmatprep.subr.bf16.mxu0 0
        %1110 = vmatpush1.bf16.msra.mxu0 0
        %1111 = vmatprep.mubr.bf16.mxu0 0
        %1112 = vmatmul.mubr.bf16.gmra.mrb[0].mxu0 %v1071
        %v1113 = vpop.f32.mrb[0].mxu0
        %v1114 = vadd.f32 0.0, %v1113
        %v1115 = vpop.f32.mrb[0].mxu0
        %v1116 = vadd.f32 0.0, %v1115
        %v1117 = vpop.f32.mrb[0].mxu0
        %v1118 = vpop.f32.mrb[0].mxu0
        %1119 = vdwg.mxu0
        %v1121 = vsel %vm413, %v1055, 0
        %v1124 = vsel %vm417, %v1056, 0
        %v1127 = vsel %vm417, %v1057, 0
        %1129 = vmatprep.subr.bf16.mxu0 %v1127
        %1130 = vmatpush1.bf16.msra.mxu0 %v1124
        %1131 = vmatprep.subr.bf16.mxu0 0
        %1132 = vmatpush1.bf16.msra.mxu0 0
        %1133 = vmatprep.subr.bf16.mxu0 0
        %1134 = vmatpush1.bf16.msra.mxu0 0
        %1135 = vmatprep.subr.bf16.mxu0 0
        %1136 = vmatpush1.bf16.msra.mxu0 0
        %1137 = vmatprep.subr.bf16.mxu0 0
        %1138 = vmatpush1.bf16.msra.mxu0 0
        %1139 = vmatprep.subr.bf16.mxu0 0
        %1140 = vmatpush1.bf16.msra.mxu0 0
        %1141 = vmatprep.subr.bf16.mxu0 0
        %1142 = vmatpush1.bf16.msra.mxu0 0
        %1143 = vmatprep.subr.bf16.mxu0 0
        %1144 = vmatpush1.bf16.msra.mxu0 0
        %1145 = vmatprep.subr.bf16.mxu0 0
        %1146 = vmatpush1.bf16.msra.mxu0 0
        %1147 = vmatprep.subr.bf16.mxu0 0
        %1148 = vmatpush1.bf16.msra.mxu0 0
        %1149 = vmatprep.subr.bf16.mxu0 0
        %1150 = vmatpush1.bf16.msra.mxu0 0
        %1151 = vmatprep.subr.bf16.mxu0 0
        %1152 = vmatpush1.bf16.msra.mxu0 0
        %1153 = vmatprep.subr.bf16.mxu0 0
        %1154 = vmatpush1.bf16.msra.mxu0 0
        %1155 = vmatprep.subr.bf16.mxu0 0
        %1156 = vmatpush1.bf16.msra.mxu0 0
        %1157 = vmatprep.subr.bf16.mxu0 0
        %1158 = vmatpush1.bf16.msra.mxu0 0
        %1159 = vmatprep.subr.bf16.mxu0 0
        %1160 = vmatpush1.bf16.msra.mxu0 0
        %1161 = vmatprep.mubr.bf16.mxu0 0
        %1162 = vmatmul.mubr.bf16.gmra.mrb[0].mxu0 %v1121
        %v1163 = vpop.f32.mrb[0].mxu0
        %v1164 = vadd.f32 %v1114, %v1163
        %v1165 = vpop.f32.mrb[0].mxu0
        %v1166 = vadd.f32 %v1116, %v1165
        %v1167 = vpop.f32.mrb[0].mxu0
        %v1168 = vpop.f32.mrb[0].mxu0
        %1169 = vdwg.mxu0
        %1170 = vrot.lane.b32.xlu0 %v1045, 15
        %v1171 = vpop.permute.xlu0 %1170
        %1172 = vrot.lane.b32.xlu0 %v1046, 15
        %v1173 = vpop.permute.xlu0 %1172
        %v1174 = vsel %vm519, %v1171, %v1173
        %v1175 = vsel %vm519, %v1173, %v1171
        %v1176 = vmul.f32 %v1175, %v528
        %v1177 = vmul.f32 %v1174, %v532
        %s1178 = scalar_lea.vmem %s3, 8
        %v1179 = vld [vmem:[%s1178] sm:$0xf]
        %v1180 = vpack.c.bf16 %v1176, %v1176
        %v1181 = vpack.c.bf16 %v1177, %v1177
        %v1183 = vsel %vm413, %v1179, 0
        %v1186 = vsel %vm417, %v1180, 0
        %v1189 = vsel %vm417, %v1181, 0
        %1191 = vmatprep.subr.bf16.mxu0 %v1189
        %1192 = vmatpush1.bf16.msra.mxu0 %v1186
        %1193 = vmatprep.subr.bf16.mxu0 0
        %1194 = vmatpush1.bf16.msra.mxu0 0
        %1195 = vmatprep.subr.bf16.mxu0 0
        %1196 = vmatpush1.bf16.msra.mxu0 0
        %1197 = vmatprep.subr.bf16.mxu0 0
        %1198 = vmatpush1.bf16.msra.mxu0 0
        %1199 = vmatprep.subr.bf16.mxu0 0
        %1200 = vmatpush1.bf16.msra.mxu0 0
        %1201 = vmatprep.subr.bf16.mxu0 0
        %1202 = vmatpush1.bf16.msra.mxu0 0
        %1203 = vmatprep.subr.bf16.mxu0 0
        %1204 = vmatpush1.bf16.msra.mxu0 0
        %1205 = vmatprep.subr.bf16.mxu0 0
        %1206 = vmatpush1.bf16.msra.mxu0 0
        %1207 = vmatprep.subr.bf16.mxu0 0
        %1208 = vmatpush1.bf16.msra.mxu0 0
        %1209 = vmatprep.subr.bf16.mxu0 0
        %1210 = vmatpush1.bf16.msra.mxu0 0
        %1211 = vmatprep.subr.bf16.mxu0 0
        %1212 = vmatpush1.bf16.msra.mxu0 0
        %1213 = vmatprep.subr.bf16.mxu0 0
        %1214 = vmatpush1.bf16.msra.mxu0 0
        %1215 = vmatprep.subr.bf16.mxu0 0
        %1216 = vmatpush1.bf16.msra.mxu0 0
        %1217 = vmatprep.subr.bf16.mxu0 0
        %1218 = vmatpush1.bf16.msra.mxu0 0
        %1219 = vmatprep.subr.bf16.mxu0 0
        %1220 = vmatpush1.bf16.msra.mxu0 0
        %1221 = vmatprep.subr.bf16.mxu0 0
        %1222 = vmatpush1.bf16.msra.mxu0 0
        %1223 = vmatprep.mubr.bf16.mxu0 0
        %1224 = vmatmul.mubr.bf16.gmra.mrb[0].mxu0 %v1183
        %v1225 = vpop.f32.mrb[0].mxu0
        %v1226 = vadd.f32 0.0, %v1225
        %v1227 = vpop.f32.mrb[0].mxu0
        %v1228 = vadd.f32 0.0, %v1227
        %v1229 = vpop.f32.mrb[0].mxu0
        %v1230 = vpop.f32.mrb[0].mxu0
        %1231 = vdwg.mxu0
        %v1232 = vadd.f32 %v1164, %v1226
        %v1233 = vadd.f32 %v1166, %v1228
        %1234 = vrot.lane.b32.xlu0 %v1045, 1
        %v1235 = vpop.permute.xlu0 %1234
        %1236 = vrot.lane.b32.xlu0 %v1046, 1
        %v1237 = vpop.permute.xlu0 %1236
        %v1238 = vsel %vm597, %v1235, %v1237
        %v1239 = vsel %vm597, %v1237, %v1235
        %v1240 = vmul.f32 %v1239, %v606
        %v1241 = vmul.f32 %v1238, %v610
        %s1242 = scalar_lea.vmem %s3, 12
        %v1243 = vld [vmem:[%s1242] sm:$0xf]
        %v1244 = vpack.c.bf16 %v1240, %v1240
        %v1245 = vpack.c.bf16 %v1241, %v1241
        %v1247 = vsel %vm413, %v1243, 0
        %v1250 = vsel %vm417, %v1244, 0
        %v1253 = vsel %vm417, %v1245, 0
        %1255 = vmatprep.subr.bf16.mxu0 %v1253
        %1256 = vmatpush1.bf16.msra.mxu0 %v1250
        %1257 = vmatprep.subr.bf16.mxu0 0
        %1258 = vmatpush1.bf16.msra.mxu0 0
        %1259 = vmatprep.subr.bf16.mxu0 0
        %1260 = vmatpush1.bf16.msra.mxu0 0
        %1261 = vmatprep.subr.bf16.mxu0 0
        %1262 = vmatpush1.bf16.msra.mxu0 0
        %1263 = vmatprep.subr.bf16.mxu0 0
        %1264 = vmatpush1.bf16.msra.mxu0 0
        %1265 = vmatprep.subr.bf16.mxu0 0
        %1266 = vmatpush1.bf16.msra.mxu0 0
        %1267 = vmatprep.subr.bf16.mxu0 0
        %1268 = vmatpush1.bf16.msra.mxu0 0
        %1269 = vmatprep.subr.bf16.mxu0 0
        %1270 = vmatpush1.bf16.msra.mxu0 0
        %1271 = vmatprep.subr.bf16.mxu0 0
        %1272 = vmatpush1.bf16.msra.mxu0 0
        %1273 = vmatprep.subr.bf16.mxu0 0
        %1274 = vmatpush1.bf16.msra.mxu0 0
        %1275 = vmatprep.subr.bf16.mxu0 0
        %1276 = vmatpush1.bf16.msra.mxu0 0
        %1277 = vmatprep.subr.bf16.mxu0 0
        %1278 = vmatpush1.bf16.msra.mxu0 0
        %1279 = vmatprep.subr.bf16.mxu0 0
        %1280 = vmatpush1.bf16.msra.mxu0 0
        %1281 = vmatprep.subr.bf16.mxu0 0
        %1282 = vmatpush1.bf16.msra.mxu0 0
        %1283 = vmatprep.subr.bf16.mxu0 0
        %1284 = vmatpush1.bf16.msra.mxu0 0
        %1285 = vmatprep.subr.bf16.mxu0 0
        %1286 = vmatpush1.bf16.msra.mxu0 0
        %1287 = vmatprep.mubr.bf16.mxu0 0
        %1288 = vmatmul.mubr.bf16.gmra.mrb[0].mxu0 %v1247
        %v1289 = vpop.f32.mrb[0].mxu0
        %v1290 = vadd.f32 0.0, %v1289
        %v1291 = vpop.f32.mrb[0].mxu0
        %v1292 = vadd.f32 0.0, %v1291
        %v1293 = vpop.f32.mrb[0].mxu0
        %v1294 = vpop.f32.mrb[0].mxu0
        %1295 = vdwg.mxu0
        %v1296 = vadd.f32 %v1232, %v1290
        %v1297 = vadd.f32 %v1233, %v1292
        %s1298 = scalar_lea.vmem %s3, 16
        %v1299 = vld [vmem:[%s1298] sm:$0xf]
        %v1300 = vpack.c.bf16 %v1045, %v1045
        %v1301 = vpack.c.bf16 %v1046, %v1046
        %v1303 = vsel %vm413, %v1299, 0
        %v1306 = vsel %vm417, %v1300, 0
        %v1309 = vsel %vm417, %v1301, 0
        %1311 = vmatprep.subr.bf16.mxu0 %v1309
        %1312 = vmatpush1.bf16.msra.mxu0 %v1306
        %1313 = vmatprep.subr.bf16.mxu0 0
        %1314 = vmatpush1.bf16.msra.mxu0 0
        %1315 = vmatprep.subr.bf16.mxu0 0
        %1316 = vmatpush1.bf16.msra.mxu0 0
        %1317 = vmatprep.subr.bf16.mxu0 0
        %1318 = vmatpush1.bf16.msra.mxu0 0
        %1319 = vmatprep.subr.bf16.mxu0 0
        %1320 = vmatpush1.bf16.msra.mxu0 0
        %1321 = vmatprep.subr.bf16.mxu0 0
        %1322 = vmatpush1.bf16.msra.mxu0 0
        %1323 = vmatprep.subr.bf16.mxu0 0
        %1324 = vmatpush1.bf16.msra.mxu0 0
        %1325 = vmatprep.subr.bf16.mxu0 0
        %1326 = vmatpush1.bf16.msra.mxu0 0
        %1327 = vmatprep.subr.bf16.mxu0 0
        %1328 = vmatpush1.bf16.msra.mxu0 0
        %1329 = vmatprep.subr.bf16.mxu0 0
        %1330 = vmatpush1.bf16.msra.mxu0 0
        %1331 = vmatprep.subr.bf16.mxu0 0
        %1332 = vmatpush1.bf16.msra.mxu0 0
        %1333 = vmatprep.subr.bf16.mxu0 0
        %1334 = vmatpush1.bf16.msra.mxu0 0
        %1335 = vmatprep.subr.bf16.mxu0 0
        %1336 = vmatpush1.bf16.msra.mxu0 0
        %1337 = vmatprep.subr.bf16.mxu0 0
        %1338 = vmatpush1.bf16.msra.mxu0 0
        %1339 = vmatprep.subr.bf16.mxu0 0
        %1340 = vmatpush1.bf16.msra.mxu0 0
        %1341 = vmatprep.subr.bf16.mxu0 0
        %1342 = vmatpush1.bf16.msra.mxu0 0
        %1343 = vmatprep.mubr.bf16.mxu0 0
        %1344 = vmatmul.mubr.bf16.gmra.mrb[0].mxu0 %v1303
        %v1345 = vpop.f32.mrb[0].mxu0
        %v1346 = vadd.f32 0.0, %v1345
        %v1347 = vpop.f32.mrb[0].mxu0
        %v1348 = vadd.f32 0.0, %v1347
        %v1349 = vpop.f32.mrb[0].mxu0
        %v1350 = vpop.f32.mrb[0].mxu0
        %1351 = vdwg.mxu0
        %v1352 = vadd.f32 %v1296, %v1346
        %v1353 = vadd.f32 %v1297, %v1348
        %1354 = vrot.lane.b32.xlu0 %v1045, 127
        %v1355 = vpop.permute.xlu0 %1354
        %1356 = vrot.lane.b32.xlu0 %v1046, 127
        %v1357 = vpop.permute.xlu0 %1356
        %v1358 = vsel %vm731, %v1355, %v1357
        %v1359 = vsel %vm731, %v1357, %v1355
        %v1360 = vmul.f32 %v1358, %v740
        %v1361 = vmul.f32 %v1359, %v744
        %s1362 = scalar_lea.vmem %s3, 20
        %v1363 = vld [vmem:[%s1362] sm:$0xf]
        %v1364 = vpack.c.bf16 %v1360, %v1360
        %v1365 = vpack.c.bf16 %v1361, %v1361
        %v1367 = vsel %vm413, %v1363, 0
        %v1370 = vsel %vm417, %v1364, 0
        %v1373 = vsel %vm417, %v1365, 0
        %1375 = vmatprep.subr.bf16.mxu0 %v1373
        %1376 = vmatpush1.bf16.msra.mxu0 %v1370
        %1377 = vmatprep.subr.bf16.mxu0 0
        %1378 = vmatpush1.bf16.msra.mxu0 0
        %1379 = vmatprep.subr.bf16.mxu0 0
        %1380 = vmatpush1.bf16.msra.mxu0 0
        %1381 = vmatprep.subr.bf16.mxu0 0
        %1382 = vmatpush1.bf16.msra.mxu0 0
        %1383 = vmatprep.subr.bf16.mxu0 0
        %1384 = vmatpush1.bf16.msra.mxu0 0
        %1385 = vmatprep.subr.bf16.mxu0 0
        %1386 = vmatpush1.bf16.msra.mxu0 0
        %1387 = vmatprep.subr.bf16.mxu0 0
        %1388 = vmatpush1.bf16.msra.mxu0 0
        %1389 = vmatprep.subr.bf16.mxu0 0
        %1390 = vmatpush1.bf16.msra.mxu0 0
        %1391 = vmatprep.subr.bf16.mxu0 0
        %1392 = vmatpush1.bf16.msra.mxu0 0
        %1393 = vmatprep.subr.bf16.mxu0 0
        %1394 = vmatpush1.bf16.msra.mxu0 0
        %1395 = vmatprep.subr.bf16.mxu0 0
        %1396 = vmatpush1.bf16.msra.mxu0 0
        %1397 = vmatprep.subr.bf16.mxu0 0
        %1398 = vmatpush1.bf16.msra.mxu0 0
        %1399 = vmatprep.subr.bf16.mxu0 0
        %1400 = vmatpush1.bf16.msra.mxu0 0
        %1401 = vmatprep.subr.bf16.mxu0 0
        %1402 = vmatpush1.bf16.msra.mxu0 0
        %1403 = vmatprep.subr.bf16.mxu0 0
        %1404 = vmatpush1.bf16.msra.mxu0 0
        %1405 = vmatprep.subr.bf16.mxu0 0
        %1406 = vmatpush1.bf16.msra.mxu0 0
        %1407 = vmatprep.mubr.bf16.mxu0 0
        %1408 = vmatmul.mubr.bf16.gmra.mrb[0].mxu0 %v1367
        %v1409 = vpop.f32.mrb[0].mxu0
        %v1410 = vadd.f32 0.0, %v1409
        %v1411 = vpop.f32.mrb[0].mxu0
        %v1412 = vadd.f32 0.0, %v1411
        %v1413 = vpop.f32.mrb[0].mxu0
        %v1414 = vpop.f32.mrb[0].mxu0
        %1415 = vdwg.mxu0
        %v1416 = vadd.f32 %v1352, %v1410
        %v1417 = vadd.f32 %v1353, %v1412
        %1418 = vrot.lane.b32.xlu0 %v1045, 113
        %v1419 = vpop.permute.xlu0 %1418
        %1420 = vrot.lane.b32.xlu0 %v1046, 113
        %v1421 = vpop.permute.xlu0 %1420
        %v1422 = vsel %vm809, %v1419, %v1421
        %v1423 = vsel %vm809, %v1421, %v1419
        %v1424 = vmul.f32 %v1422, %v818
        %v1425 = vmul.f32 %v1423, %v822
        %s1426 = scalar_lea.vmem %s3, 24
        %v1427 = vld [vmem:[%s1426] sm:$0xf]
        %v1428 = vpack.c.bf16 %v1424, %v1424
        %v1429 = vpack.c.bf16 %v1425, %v1425
        %v1431 = vsel %vm413, %v1427, 0
        %v1434 = vsel %vm417, %v1428, 0
        %v1437 = vsel %vm417, %v1429, 0
        %1439 = vmatprep.subr.bf16.mxu0 %v1437
        %1440 = vmatpush1.bf16.msra.mxu0 %v1434
        %1441 = vmatprep.subr.bf16.mxu0 0
        %1442 = vmatpush1.bf16.msra.mxu0 0
        %1443 = vmatprep.subr.bf16.mxu0 0
        %1444 = vmatpush1.bf16.msra.mxu0 0
        %1445 = vmatprep.subr.bf16.mxu0 0
        %1446 = vmatpush1.bf16.msra.mxu0 0
        %1447 = vmatprep.subr.bf16.mxu0 0
        %1448 = vmatpush1.bf16.msra.mxu0 0
        %1449 = vmatprep.subr.bf16.mxu0 0
        %1450 = vmatpush1.bf16.msra.mxu0 0
        %1451 = vmatprep.subr.bf16.mxu0 0
        %1452 = vmatpush1.bf16.msra.mxu0 0
        %1453 = vmatprep.subr.bf16.mxu0 0
        %1454 = vmatpush1.bf16.msra.mxu0 0
        %1455 = vmatprep.subr.bf16.mxu0 0
        %1456 = vmatpush1.bf16.msra.mxu0 0
        %1457 = vmatprep.subr.bf16.mxu0 0
        %1458 = vmatpush1.bf16.msra.mxu0 0
        %1459 = vmatprep.subr.bf16.mxu0 0
        %1460 = vmatpush1.bf16.msra.mxu0 0
        %1461 = vmatprep.subr.bf16.mxu0 0
        %1462 = vmatpush1.bf16.msra.mxu0 0
        %1463 = vmatprep.subr.bf16.mxu0 0
        %1464 = vmatpush1.bf16.msra.mxu0 0
        %1465 = vmatprep.subr.bf16.mxu0 0
        %1466 = vmatpush1.bf16.msra.mxu0 0
        %1467 = vmatprep.subr.bf16.mxu0 0
        %1468 = vmatpush1.bf16.msra.mxu0 0
        %1469 = vmatprep.subr.bf16.mxu0 0
        %1470 = vmatpush1.bf16.msra.mxu0 0
        %1471 = vmatprep.mubr.bf16.mxu0 0
        %1472 = vmatmul.mubr.bf16.gmra.mrb[0].mxu0 %v1431
        %v1473 = vpop.f32.mrb[0].mxu0
        %v1474 = vadd.f32 0.0, %v1473
        %v1475 = vpop.f32.mrb[0].mxu0
        %v1476 = vadd.f32 0.0, %v1475
        %v1477 = vpop.f32.mrb[0].mxu0
        %v1478 = vpop.f32.mrb[0].mxu0
        %1479 = vdwg.mxu0
        %v1480 = vadd.f32 %v1416, %v1474
        %v1481 = vadd.f32 %v1417, %v1476
        %1482 = vrot.lane.b32.xlu0 %v1045, 112
        %v1483 = vpop.permute.xlu0 %1482
        %1484 = vrot.lane.b32.xlu0 %v1046, 112
        %v1485 = vpop.permute.xlu0 %1484
        %v1486 = vsel %vm887, %v1483, %v1485
        %v1487 = vsel %vm887, %v1485, %v1483
        %v1488 = vmul.f32 %v1486, %v896
        %v1489 = vmul.f32 %v1487, %v900
        %s1490 = scalar_lea.vmem %s3, 28
        %v1491 = vld [vmem:[%s1490] sm:$0xf]
        %v1492 = vpack.c.bf16 %v1488, %v1488
        %v1493 = vpack.c.bf16 %v1489, %v1489
        %v1495 = vsel %vm413, %v1491, 0
        %v1498 = vsel %vm417, %v1492, 0
        %v1501 = vsel %vm417, %v1493, 0
        %1503 = vmatprep.subr.bf16.mxu0 %v1501
        %1504 = vmatpush1.bf16.msra.mxu0 %v1498
        %1505 = vmatprep.subr.bf16.mxu0 0
        %1506 = vmatpush1.bf16.msra.mxu0 0
        %1507 = vmatprep.subr.bf16.mxu0 0
        %1508 = vmatpush1.bf16.msra.mxu0 0
        %1509 = vmatprep.subr.bf16.mxu0 0
        %1510 = vmatpush1.bf16.msra.mxu0 0
        %1511 = vmatprep.subr.bf16.mxu0 0
        %1512 = vmatpush1.bf16.msra.mxu0 0
        %1513 = vmatprep.subr.bf16.mxu0 0
        %1514 = vmatpush1.bf16.msra.mxu0 0
        %1515 = vmatprep.subr.bf16.mxu0 0
        %1516 = vmatpush1.bf16.msra.mxu0 0
        %1517 = vmatprep.subr.bf16.mxu0 0
        %1518 = vmatpush1.bf16.msra.mxu0 0
        %1519 = vmatprep.subr.bf16.mxu0 0
        %1520 = vmatpush1.bf16.msra.mxu0 0
        %1521 = vmatprep.subr.bf16.mxu0 0
        %1522 = vmatpush1.bf16.msra.mxu0 0
        %1523 = vmatprep.subr.bf16.mxu0 0
        %1524 = vmatpush1.bf16.msra.mxu0 0
        %1525 = vmatprep.subr.bf16.mxu0 0
        %1526 = vmatpush1.bf16.msra.mxu0 0
        %1527 = vmatprep.subr.bf16.mxu0 0
        %1528 = vmatpush1.bf16.msra.mxu0 0
        %1529 = vmatprep.subr.bf16.mxu0 0
        %1530 = vmatpush1.bf16.msra.mxu0 0
        %1531 = vmatprep.subr.bf16.mxu0 0
        %1532 = vmatpush1.bf16.msra.mxu0 0
        %1533 = vmatprep.subr.bf16.mxu0 0
        %1534 = vmatpush1.bf16.msra.mxu0 0
        %1535 = vmatprep.mubr.bf16.mxu0 0
        %1536 = vmatmul.mubr.bf16.gmra.mrb[0].mxu0 %v1495
        %v1537 = vpop.f32.mrb[0].mxu0
        %v1538 = vadd.f32 0.0, %v1537
        %v1539 = vpop.f32.mrb[0].mxu0
        %v1540 = vadd.f32 0.0, %v1539
        %v1541 = vpop.f32.mrb[0].mxu0
        %v1542 = vpop.f32.mrb[0].mxu0
        %1543 = vdwg.mxu0
        %v1544 = vadd.f32 %v1480, %v1538
        %v1545 = vadd.f32 %v1481, %v1540
        %1546 = vrot.lane.b32.xlu0 %v1045, 111
        %v1547 = vpop.permute.xlu0 %1546
        %1548 = vrot.lane.b32.xlu0 %v1046, 111
        %v1549 = vpop.permute.xlu0 %1548
        %v1550 = vsel %vm965, %v1547, %v1549
        %v1551 = vsel %vm965, %v1549, %v1547
        %v1552 = vmul.f32 %v1550, %v974
        %v1553 = vmul.f32 %v1551, %v978
        %s1554 = scalar_lea.vmem %s3, 32
        %v1555 = vld [vmem:[%s1554] sm:$0xf]
        %v1556 = vpack.c.bf16 %v1552, %v1552
        %v1557 = vpack.c.bf16 %v1553, %v1553
        %v1559 = vsel %vm413, %v1555, 0
        %v1562 = vsel %vm417, %v1556, 0
        %v1565 = vsel %vm417, %v1557, 0
        %1567 = vmatprep.subr.bf16.mxu0 %v1565
        %1568 = vmatpush1.bf16.msra.mxu0 %v1562
        %1569 = vmatprep.subr.bf16.mxu0 0
        %1570 = vmatpush1.bf16.msra.mxu0 0
        %1571 = vmatprep.subr.bf16.mxu0 0
        %1572 = vmatpush1.bf16.msra.mxu0 0
        %1573 = vmatprep.subr.bf16.mxu0 0
        %1574 = vmatpush1.bf16.msra.mxu0 0
        %1575 = vmatprep.subr.bf16.mxu0 0
        %1576 = vmatpush1.bf16.msra.mxu0 0
        %1577 = vmatprep.subr.bf16.mxu0 0
        %1578 = vmatpush1.bf16.msra.mxu0 0
        %1579 = vmatprep.subr.bf16.mxu0 0
        %1580 = vmatpush1.bf16.msra.mxu0 0
        %1581 = vmatprep.subr.bf16.mxu0 0
        %1582 = vmatpush1.bf16.msra.mxu0 0
        %1583 = vmatprep.subr.bf16.mxu0 0
        %1584 = vmatpush1.bf16.msra.mxu0 0
        %1585 = vmatprep.subr.bf16.mxu0 0
        %1586 = vmatpush1.bf16.msra.mxu0 0
        %1587 = vmatprep.subr.bf16.mxu0 0
        %1588 = vmatpush1.bf16.msra.mxu0 0
        %1589 = vmatprep.subr.bf16.mxu0 0
        %1590 = vmatpush1.bf16.msra.mxu0 0
        %1591 = vmatprep.subr.bf16.mxu0 0
        %1592 = vmatpush1.bf16.msra.mxu0 0
        %1593 = vmatprep.subr.bf16.mxu0 0
        %1594 = vmatpush1.bf16.msra.mxu0 0
        %1595 = vmatprep.subr.bf16.mxu0 0
        %1596 = vmatpush1.bf16.msra.mxu0 0
        %1597 = vmatprep.subr.bf16.mxu0 0
        %1598 = vmatpush1.bf16.msra.mxu0 0
        %1599 = vmatprep.mubr.bf16.mxu0 0
        %1600 = vmatmul.mubr.bf16.gmra.mrb[0].mxu0 %v1559
        %v1601 = vpop.f32.mrb[0].mxu0
        %v1602 = vadd.f32 0.0, %v1601
        %v1603 = vpop.f32.mrb[0].mxu0
        %v1604 = vadd.f32 0.0, %v1603
        %v1605 = vpop.f32.mrb[0].mxu0
        %v1606 = vpop.f32.mrb[0].mxu0
        %1607 = vdwg.mxu0
        %v1608 = vadd.f32 %v1544, %v1602
        %v1609 = vadd.f32 %v1545, %v1604
        %v1610 = vld [vmem:[%s4] sm:$0xff]
        %1612 = vset.pattern.permute.xlu0 0
        %1613 = vperm.xlu0 %1612, %v1610
        %v1614 = vpop.permute.xlu0 %1613
        %v1616 = vadd.f32 %v1608, %v1614
        %v1617 = vadd.f32 %v1609, %v1614
        %v1618 = vadd.f32 %v1616, %v1617
        %1619 = vadd.xlane.f32.xlu0 %v1618
        %v1620 = vpop.xlane.xlu0 %1619
        %v1621 = vmul.f32 %v1620, 0.00390625
        %v1622 = vld [vmem:[%s5] sm:$0x3]
        %v1623 = vld [vmem:[%s6] sm:$0x3]
        %v1625 = vsel %vm413, %v1622, 0
        %1627 = vmatprep.subr.mxu0 0.0
        %1628 = vmatpush1.msra.mxu0 %v1621
        %1629 = vmatprep.subr.mxu0 0.0
        %1630 = vmatpush1.msra.mxu0 0.0
        %1631 = vmatprep.subr.mxu0 0.0
        %1632 = vmatpush1.msra.mxu0 0.0
        %1633 = vmatprep.subr.mxu0 0.0
        %1634 = vmatpush1.msra.mxu0 0.0
        %1635 = vmatprep.subr.mxu0 0.0
        %1636 = vmatpush1.msra.mxu0 0.0
        %1637 = vmatprep.subr.mxu0 0.0
        %1638 = vmatpush1.msra.mxu0 0.0
        %1639 = vmatprep.subr.mxu0 0.0
        %1640 = vmatpush1.msra.mxu0 0.0
        %1641 = vmatprep.subr.mxu0 0.0
        %1642 = vmatpush1.msra.mxu0 0.0
        %1643 = vmatprep.subr.mxu0 0.0
        %1644 = vmatpush1.msra.mxu0 0.0
        %1645 = vmatprep.subr.mxu0 0.0
        %1646 = vmatpush1.msra.mxu0 0.0
        %1647 = vmatprep.subr.mxu0 0.0
        %1648 = vmatpush1.msra.mxu0 0.0
        %1649 = vmatprep.subr.mxu0 0.0
        %1650 = vmatpush1.msra.mxu0 0.0
        %1651 = vmatprep.subr.mxu0 0.0
        %1652 = vmatpush1.msra.mxu0 0.0
        %1653 = vmatprep.subr.mxu0 0.0
        %1654 = vmatpush1.msra.mxu0 0.0
        %1655 = vmatprep.subr.mxu0 0.0
        %1656 = vmatpush1.msra.mxu0 0.0
        %1657 = vmatprep.subr.mxu0 0.0
        %1658 = vmatpush1.msra.mxu0 0.0
        %1659 = vmatprep.subr.mxu0 0.0
        %1660 = vmatpush1.msra.mxu0 0.0
        %1661 = vmatprep.subr.mxu0 0.0
        %1662 = vmatpush1.msra.mxu0 0.0
        %1663 = vmatprep.subr.mxu0 0.0
        %1664 = vmatpush1.msra.mxu0 0.0
        %1665 = vmatprep.subr.mxu0 0.0
        %1666 = vmatpush1.msra.mxu0 0.0
        %1667 = vmatprep.subr.mxu0 0.0
        %1668 = vmatpush1.msra.mxu0 0.0
        %1669 = vmatprep.subr.mxu0 0.0
        %1670 = vmatpush1.msra.mxu0 0.0
        %1671 = vmatprep.subr.mxu0 0.0
        %1672 = vmatpush1.msra.mxu0 0.0
        %1673 = vmatprep.subr.mxu0 0.0
        %1674 = vmatpush1.msra.mxu0 0.0
        %1675 = vmatprep.subr.mxu0 0.0
        %1676 = vmatpush1.msra.mxu0 0.0
        %1677 = vmatprep.subr.mxu0 0.0
        %1678 = vmatpush1.msra.mxu0 0.0
        %1679 = vmatprep.subr.mxu0 0.0
        %1680 = vmatpush1.msra.mxu0 0.0
        %1681 = vmatprep.subr.mxu0 0.0
        %1682 = vmatpush1.msra.mxu0 0.0
        %1683 = vmatprep.subr.mxu0 0.0
        %1684 = vmatpush1.msra.mxu0 0.0
        %1685 = vmatprep.subr.mxu0 0.0
        %1686 = vmatpush1.msra.mxu0 0.0
        %1687 = vmatprep.subr.mxu0 0.0
        %1688 = vmatpush1.msra.mxu0 0.0
        %1689 = vmatprep.subr.mxu0 0.0
        %1690 = vmatpush1.msra.mxu0 0.0
        %1691 = vmatprep.mubr.f32.mxu0 0.0
        %1692 = vmatmul.mubr.f32.gmra.mrb[0].mxu0 %v1625
        %v1693 = vpop.f32.mrb[0].mxu0
        %v1694 = vadd.f32 %v1623, %v1693
        %v1695 = vpop.f32.mrb[0].mxu0
        %1696 = vdwg.mxu0
        %v1697 = vmax.f32 %v1694, 0.0
        %v1698 = vld [vmem:[%s7] sm:$0xff]
        %v1699 = vld [vmem:[%s7 + $0x8] sm:$0xff]
        %v1700 = vld [vmem:[%s8] sm:$0xff]
        %v1701 = vld [vmem:[%s8 + $0x8] sm:$0xff]
        %vm1702 = vcmask 15360
        %v1704 = vsel %vm1702, %v1698, 0
        %v1707 = vsel %vm1702, %v1699, 0
        %vm1709 = vcmask 1041408
        %v1711 = vsel %vm1709, %v1697, 0
        %1713 = vmatprep.subr.mxu0 0.0
        %1714 = vmatpush1.msra.mxu0 %v1711
        %1715 = vmatprep.subr.mxu0 0.0
        %1716 = vmatpush1.msra.mxu0 0.0
        %1717 = vmatprep.subr.mxu0 0.0
        %1718 = vmatpush1.msra.mxu0 0.0
        %1719 = vmatprep.subr.mxu0 0.0
        %1720 = vmatpush1.msra.mxu0 0.0
        %1721 = vmatprep.subr.mxu0 0.0
        %1722 = vmatpush1.msra.mxu0 0.0
        %1723 = vmatprep.subr.mxu0 0.0
        %1724 = vmatpush1.msra.mxu0 0.0
        %1725 = vmatprep.subr.mxu0 0.0
        %1726 = vmatpush1.msra.mxu0 0.0
        %1727 = vmatprep.subr.mxu0 0.0
        %1728 = vmatpush1.msra.mxu0 0.0
        %1729 = vmatprep.subr.mxu0 0.0
        %1730 = vmatpush1.msra.mxu0 0.0
        %1731 = vmatprep.subr.mxu0 0.0
        %1732 = vmatpush1.msra.mxu0 0.0
        %1733 = vmatprep.subr.mxu0 0.0
        %1734 = vmatpush1.msra.mxu0 0.0
        %1735 = vmatprep.subr.mxu0 0.0
        %1736 = vmatpush1.msra.mxu0 0.0
        %1737 = vmatprep.subr.mxu0 0.0
        %1738 = vmatpush1.msra.mxu0 0.0
        %1739 = vmatprep.subr.mxu0 0.0
        %1740 = vmatpush1.msra.mxu0 0.0
        %1741 = vmatprep.subr.mxu0 0.0
        %1742 = vmatpush1.msra.mxu0 0.0
        %1743 = vmatprep.subr.mxu0 0.0
        %1744 = vmatpush1.msra.mxu0 0.0
        %1745 = vmatprep.subr.mxu0 0.0
        %1746 = vmatpush1.msra.mxu0 0.0
        %1747 = vmatprep.subr.mxu0 0.0
        %1748 = vmatpush1.msra.mxu0 0.0
        %1749 = vmatprep.subr.mxu0 0.0
        %1750 = vmatpush1.msra.mxu0 0.0
        %1751 = vmatprep.subr.mxu0 0.0
        %1752 = vmatpush1.msra.mxu0 0.0
        %1753 = vmatprep.subr.mxu0 0.0
        %1754 = vmatpush1.msra.mxu0 0.0
        %1755 = vmatprep.subr.mxu0 0.0
        %1756 = vmatpush1.msra.mxu0 0.0
        %1757 = vmatprep.subr.mxu0 0.0
        %1758 = vmatpush1.msra.mxu0 0.0
        %1759 = vmatprep.subr.mxu0 0.0
        %1760 = vmatpush1.msra.mxu0 0.0
        %1761 = vmatprep.subr.mxu0 0.0
        %1762 = vmatpush1.msra.mxu0 0.0
        %1763 = vmatprep.subr.mxu0 0.0
        %1764 = vmatpush1.msra.mxu0 0.0
        %1765 = vmatprep.subr.mxu0 0.0
        %1766 = vmatpush1.msra.mxu0 0.0
        %1767 = vmatprep.subr.mxu0 0.0
        %1768 = vmatpush1.msra.mxu0 0.0
        %1769 = vmatprep.subr.mxu0 0.0
        %1770 = vmatpush1.msra.mxu0 0.0
        %1771 = vmatprep.subr.mxu0 0.0
        %1772 = vmatpush1.msra.mxu0 0.0
        %1773 = vmatprep.subr.mxu0 0.0
        %1774 = vmatpush1.msra.mxu0 0.0
        %1775 = vmatprep.subr.mxu0 0.0
        %1776 = vmatpush1.msra.mxu0 0.0
        %1777 = vmatprep.mubr.f32.mxu0 0.0
        %1778 = vmatmul.mubr.f32.gmra.mrb[0].mxu0 %v1704
        %v1779 = vpop.f32.mrb[0].mxu0
        %v1780 = vadd.f32 %v1700, %v1779
        %v1781 = vpop.f32.mrb[0].mxu0
        %1782 = vmatprep.mubr.f32.mxu0 0.0
        %1783 = vmatmul.mubr.f32.gmra.mrb[0].mxu0 %v1707
        %v1784 = vpop.f32.mrb[0].mxu0
        %v1785 = vadd.f32 %v1701, %v1784
        %v1786 = vpop.f32.mrb[0].mxu0
        %1787 = vdwg.mxu0
        %v1788 = vxor.u32 %v1780, 2147483648
        %v1789 = vmul.f32 %v1788, 1.442695
        %v1790 = vpow.pop %v1789
        %v1791 = vadd.f32 %v1790, 1.0
        %v1792 = vrcp.pop %v1791
        %v1793 = vmul.f32 1.0, %v1792
        %v1794 = vadd.f32 %v1793, 1.0
        %1796 = vset.pattern.permute.xlu0 0
        %1797 = vperm.xlu0 %1796, %v1794
        %v1798 = vpop.permute.xlu0 %1797
        %v1800 = vmul.f32 %v359, %v1798
        %v1801 = vmul.f32 %v360, %v1798
        %1803 = vset.pattern.permute.xlu0 0
        %1804 = vperm.xlu0 %1803, %v1785
        %v1805 = vpop.permute.xlu0 %1804
        %v1807 = vadd.f32 %v1800, %v1805
        %v1808 = vadd.f32 %v1801, %v1805
        %v1809 = vmax.f32 %v1807, 0.0
        %v1810 = vmax.f32 %v1808, 0.0
        %1811 = vst [vmem:[%s352] sm:$0xff] %v1809
        %1812 = vst [vmem:[%s352 + $0x8] sm:$0xff] %v1810
        %s1813 = sand.u32 %s247, 1
        %s1814 = scalar_lea.sflag [#allocation3], %s1813
        %s1815 = sand.u32 %s247, 1
        %s1816 = smul.addr %s1815, 16
        %s1817 = scalar_lea.vmem [#allocation2], %s1816
        // Predicated region
        $region61: #{tpu_custom_call.1} parent=59 // pred_check
          %p1818 = pneg %p257
        $region62: #{tpu_custom_call.1} parent=59 // pred_check_branch
          %1820 = sbr.rel (%p1818) target = $region64
        $region63: #{tpu_custom_call.1} parent=59 // pred_region
          %s1822 = ssub.s32 256, 256
          %1823 = vsyncadd %s1814, %s1822
          %s1824 = smul.addr %s24, 2
          %s1825 = smul.addr %s1824, 128
          %s1826 = scalar_lea.hbm %s10, %s1825
          %s1828 = sshll.u32 %s1817, 4
          %s1829 = int_to_ptr.vmem [resolvable:$true] %s1828
          %1831 = dma.vmem_to_hbm [thread:$0]  %s1829, 256, %s1826, %s1814
        $region64: #{tpu_custom_call.1} parent=59 // pred_fallthru
          _
      $region60: #{tpu_custom_call.1} parent=5 // pred_fallthru
        _
      %p1832 = scmp.le.s32.totalorder 2, %s19
      // Predicated region
      $region65: #{tpu_custom_call.1} parent=5 // pred_check
        %p1833 = pneg %p1832
      $region66: #{tpu_custom_call.1} parent=5 // pred_check_branch
        %1835 = sbr.rel (%p1833) target = $region68
      $region67: #{tpu_custom_call.1} parent=5 // pred_region
        %s1836 = ssub.s32 %s19, 2
        // Predicated region
        $region69: #{tpu_custom_call.1} parent=67 // pred_check
          %p1837 = pneg %p263
        $region70: #{tpu_custom_call.1} parent=67 // pred_check_branch
          %1839 = sbr.rel (%p1837) target = $region72
        $region71: #{tpu_custom_call.1} parent=67 // pred_region
          %s1840 = sand.u32 %s248, 1
          %s1841 = scalar_lea.sflag [#allocation3], %s1840
          %s1842 = sand.u32 %s248, 1
          %s1843 = smul.addr %s1842, 16
          %s1844 = scalar_lea.vmem [#allocation2], %s1843
          %1845 = dma.done %s1841, 256
        $region72: #{tpu_custom_call.1} parent=67 // pred_fallthru
          _
      $region68: #{tpu_custom_call.1} parent=5 // pred_fallthru
        _
    $region6: #{tpu_custom_call.1} parent=1 // loop_footer
      %s23 = sadd.s32 1, %s19
    $region7: #{tpu_custom_call.1} parent=1 // loop_footer_branch
      %18 = sbr.rel target = $region3
    $region8: #{tpu_custom_call.1} parent=1 // loop_exit
      _
    %1846 = vsyncpa [#allocation3], 1
    %s1847 = scalar_lea.sflag [#allocation3], 1
    %1848 = vsyncpa %s1847, 1

</llo_original>
